<compile_context>
chip_gen: v5e
topology: v5e:2x2
jax: 0.10.0
libtpu: 0.0.40
codegen_flags: <defaults>
</compile_context>

<pallas_src>
import functools

import jax
import jax.numpy as jnp
from jax import lax
from jax.experimental import pallas as pl
from jax.experimental.pallas import tpu as pltpu


def _additive_block_kernel(x_ref, wF_ref, bF_ref, wG_ref, bG_ref, out_ref,
                           y1pad_ref, *, Cc, H, W, Wp):
    """One batch tile: out[:Cc] = x1 + Fm(x2); out[Cc:] = x2 + Gm(y1).

    x_ref / out_ref : (C, Bt, Lpp) channel-major zero-halo row-padded planes
                      (real pixel (h, w) lives at lane (h+1)*Wp + (w+1)).
    y1pad_ref       : (Cc, Bt, Lpp) f32 scratch holding a zero-halo copy of y1.
    """
    Bt = x_ref.shape[1]
    S0 = Wp + 1            # first computed lane: padded (row 1, col 1)
    Ls = H * Wp            # computed slab: padded rows 1..H, every column
    halo = Wp + 1          # lanes outside the slab that taps actually read

    # Keep the y1-scratch halo zero.  Done every step (a few KB of stores)
    # instead of a program_id==0-only init: under megacore grid sharding each
    # TensorCore has its own scratch and may never run step 0.
    zeros_halo = jnp.zeros((Cc, Bt, halo), jnp.float32)
    y1pad_ref[:, :, 0:halo] = zeros_halo
    y1pad_ref[:, :, S0 + Ls:S0 + Ls + halo] = zeros_halo

    # Slab lanes that are real pixels (columns 1..W of each padded row).
    col = (lax.broadcasted_iota(jnp.int32, (1, Ls), 1) + S0) % Wp
    real_col = jnp.logical_and(col >= 1, col <= W)

    # Hoist every SMEM weight / bias scalar out of the FMA loops.
    n_w = Cc * Cc * 9
    wF = [wF_ref[i] for i in range(n_w)]
    wG = [wG_ref[i] for i in range(n_w)]
    bF = [bF_ref[i] for i in range(Cc)]
    bG = [bG_ref[i] for i in range(Cc)]

    def conv3x3(src_ref, ch0, w, acc_init):
        """3x3 SAME conv over the slab; returns Cc arrays of shape (Bt, Ls), f32.

        All 9 taps per input channel are static lane slices of the zero-halo
        padded plane src_ref[ch0 + ci] — no masks, sublane-dense, loaded once
        and reused across output channels."""
        taps = []
        for ci in range(Cc):
            for kh in range(3):
                for kw in range(3):
                    s = S0 + (kh - 1) * Wp + (kw - 1)
                    taps.append(src_ref[ch0 + ci, :, s:s + Ls].astype(jnp.float32))
        outs = []
        for co in range(Cc):
            acc = acc_init[co]                 # residual + bias already folded in
            t = 0
            for ci in range(Cc):
                for kh in range(3):
                    for kw in range(3):
                        widx = ((co * Cc + ci) * 3 + kh) * 3 + kw
                        acc = acc + w[widx] * taps[t]
                        t += 1
            outs.append(acc)
        return outs

    x1 = [x_ref[co, :, S0:S0 + Ls].astype(jnp.float32) for co in range(Cc)]
    x2 = [x_ref[Cc + co, :, S0:S0 + Ls].astype(jnp.float32) for co in range(Cc)]

    # ---- y1 = x1 + Fm(x2): taps come straight from the padded input block. ----
    y1 = conv3x3(x_ref, Cc, wF, [x1[co] + bF[co] for co in range(Cc)])
    for co in range(Cc):
        out_ref[co, :, S0:S0 + Ls] = y1[co].astype(out_ref.dtype)
        # f32 zero-halo copy feeding the Gm conv (pad columns masked back to 0).
        y1pad_ref[co, :, S0:S0 + Ls] = jnp.where(real_col, y1[co], 0.0)

    # ---- y2 = x2 + Gm(y1): y1 never leaves VMEM, no readback from out_ref. ----
    y2 = conv3x3(y1pad_ref, 0, wG, [x2[co] + bG[co] for co in range(Cc)])
    for co in range(Cc):
        out_ref[Cc + co, :, S0:S0 + Ls] = y2[co].astype(out_ref.dtype)


def _pick_batch_tile(B, C, Lpp, itemsize):
    """Pick images-per-step from a per-step VMEM footprint formula."""
    Cc = C // 2

    def footprint(bt):
        io = 2 * 2 * C * bt * Lpp * itemsize   # double-buffered input + output blocks
        scratch = Cc * bt * Lpp * 4            # f32 y1 halo scratch (single buffer)
        return io + scratch

    budget = 40 * 1024 * 1024                  # fits v7x's 64 MiB/TC with headroom
    bt = B if B < 8 else 8                     # fill all 8 sublanes whenever possible
    while B >= 8 and bt * 4 <= B and bt < 64 and footprint(bt * 2) <= budget:
        bt *= 2                                # larger DMAs, but keep >= 2 grid steps
    return bt, footprint(bt)


def additive_block_forward(x, wF, bF, wG, bG):
    """Pallas implementation of AdditiveBlock.forward (NCHW, 3x3 SAME conv Fm/Gm)."""
    B, C, H, W = x.shape
    assert C % 2 == 0
    Cc = C // 2

    Wp = W + 2
    Lp = (H + 2) * Wp
    # Taps read lanes up to Lp + 1; round the flat lane axis up to a 128-multiple.
    Lpp = ((Lp + 2 + 127) // 128) * 128

    Bt, fp = _pick_batch_tile(B, C, Lpp, jnp.dtype(x.dtype).itemsize)
    Bpad = ((B + Bt - 1) // Bt) * Bt
    grid = (Bpad // Bt,)

    # Layout plumbing (XLA): channel-major, zero spatial halo, flat padded lane axis.
    xp = jnp.pad(x, ((0, Bpad - B), (0, 0), (1, 1), (1, 1)))       # (Bpad, C, H+2, Wp)
    xp = jnp.transpose(xp, (1, 0, 2, 3)).reshape(C, Bpad, Lp)       # (C, Bpad, Lp)
    xp = jnp.pad(xp, ((0, 0), (0, 0), (0, Lpp - Lp)))               # (C, Bpad, Lpp)

    kernel = functools.partial(_additive_block_kernel, Cc=Cc, H=H, W=W, Wp=Wp)

    vmem_limit = int(min(max(fp * 5 // 4, 8 * 1024 * 1024) + (2 << 20),
                         60 * 1024 * 1024))

    out_p = pl.pallas_call(
        kernel,
        out_shape=jax.ShapeDtypeStruct((C, Bpad, Lpp), x.dtype),
        grid=grid,
        in_specs=[
            pl.BlockSpec((C, Bt, Lpp), lambda b: (0, b, 0)),         # x (VMEM, pipelined)
            pl.BlockSpec(memory_space=pltpu.MemorySpace.SMEM),       # Fm conv weights
            pl.BlockSpec(memory_space=pltpu.MemorySpace.SMEM),       # Fm bias
            pl.BlockSpec(memory_space=pltpu.MemorySpace.SMEM),       # Gm conv weights
            pl.BlockSpec(memory_space=pltpu.MemorySpace.SMEM),       # Gm bias
        ],
        out_specs=pl.BlockSpec((C, Bt, Lpp), lambda b: (0, b, 0)),
        scratch_shapes=[pltpu.VMEM((Cc, Bt, Lpp), jnp.float32)],
        compiler_params=pltpu.CompilerParams(
            dimension_semantics=("parallel",),
            vmem_limit_bytes=vmem_limit,
        ),
    )(xp,
      jnp.asarray(wF, jnp.float32).reshape(-1),
      jnp.asarray(bF, jnp.float32),
      jnp.asarray(wG, jnp.float32).reshape(-1),
      jnp.asarray(bG, jnp.float32))

    out = out_p[:, :B, :Lp].reshape(C, B, H + 2, Wp)[:, :, 1:H + 1, 1:W + 1]
    return jnp.transpose(out, (1, 0, 2, 3))


# ---------------- pure-JAX reference (for verification only) ----------------

def _conv3x3_ref(x, w, b):
    out = lax.conv_general_dilated(
        x, w, window_strides=(1, 1), padding=((1, 1), (1, 1)),
        dimension_numbers=("NCHW", "OIHW", "NCHW"))
    return out + b[None, :, None, None]


def additive_block_ref(x, wF, bF, wG, bG):
    Cc = x.shape[1] // 2
    x1, x2 = x[:, :Cc], x[:, Cc:]
    y1 = x1 + _conv3x3_ref(x2, wF, bF)
    y2 = x2 + _conv3x3_ref(y1, wG, bG)
    return jnp.concatenate([y1, y2], axis=1)


# ---------------- deterministic parameter init ----------------

def _init_conv_params(key, cout, cin, k):
    # PyTorch Conv2d default: U(-1/sqrt(fan_in), 1/sqrt(fan_in)), fan_in = cin*k*k
    kw_key, kb_key = jax.random.split(key)
    bound = 1.0 / jnp.sqrt(cin * k * k)
    w = jax.random.uniform(kw_key, (cout, cin, k, k), jnp.float32, -bound, bound)
    b = jax.random.uniform(kb_key, (cout,), jnp.float32, -bound, bound)
    return w, b


if __name__ == "__main__":
    key = jax.random.PRNGKey(0)
    kx, kF, kG = jax.random.split(key, 3)

    # Small, but sublane-filling: 16 images of 4x16x16 -> Bt = 8, grid = (2,).
    B, C, H, W = 16, 4, 16, 16
    Cc = C // 2

    x = jax.random.normal(kx, (B, C, H, W), jnp.float32)
    wF, bF = _init_conv_params(kF, Cc, Cc, 3)   # Fm = Conv2d(Cc, Cc, 3, padding=1)
    wG, bG = _init_conv_params(kG, Cc, Cc, 3)   # Gm = deepcopy-style same-shape conv

    out = jax.block_until_ready(additive_block_forward(x, wF, bF, wG, bG))

    ref = additive_block_ref(x, wF, bF, wG, bG)
    assert out.shape == (B, C, H, W)
    assert jnp.allclose(out, ref, rtol=1e-5, atol=1e-5), "mismatch vs reference"

    print("KERNEL_OK")
</pallas_src>

<mosaic_0001>
module attributes {stable_mosaic.version = 11 : i64} {
  func.func @_additive_block_kernel(%arg0: i32, %arg1: memref<4x8x384xf32, #tpu.memory_space<vmem>>, %arg2: memref<36xf32, #tpu.memory_space<smem>>, %arg3: memref<2xf32, #tpu.memory_space<smem>>, %arg4: memref<36xf32, #tpu.memory_space<smem>>, %arg5: memref<2xf32, #tpu.memory_space<smem>>, %arg6: memref<4x8x384xf32, #tpu.memory_space<vmem>>, %arg7: memref<2x8x384xf32, #tpu.memory_space<vmem>>) attributes {dimension_semantics = [#tpu.dimension_semantics<parallel>], iteration_bounds = array<i64: 2>, scalar_prefetch = 0 : i64, scratch_operands = 1 : i64, tpu.core_type = #tpu.core_type<tc>, window_params = [{transform_indices = @transform_0, window_bounds = array<i64: 4, 8, 384>}, {transform_indices = @transform_1, window_bounds = array<i64: 36>}, {transform_indices = @transform_2, window_bounds = array<i64: 2>}, {transform_indices = @transform_3, window_bounds = array<i64: 36>}, {transform_indices = @transform_4, window_bounds = array<i64: 2>}, {transform_indices = @transform_5, window_bounds = array<i64: 4, 8, 384>}]} {
    %cst = arith.constant 0.000000e+00 : f32
    %0 = vector.broadcast %cst : f32 to vector<2x8x19xf32>
    %c0 = arith.constant 0 : index
    %c0_0 = arith.constant 0 : index
    %c0_1 = arith.constant 0 : index
    %1 = vector.load %arg7[%c0, %c0_0, %c0_1] : memref<2x8x384xf32, #tpu.memory_space<vmem>>, vector<2x8x19xf32>
    tpu.vector_store %arg7[%c0, %c0_0, %c0_1], %0 {strides = array<i32>} : memref<2x8x384xf32, #tpu.memory_space<vmem>>, vector<2x8x19xf32>,
    %c0_2 = arith.constant 0 : index
    %c0_3 = arith.constant 0 : index
    %c307 = arith.constant 307 : index
    %2 = vector.load %arg7[%c0_2, %c0_3, %c307] : memref<2x8x384xf32, #tpu.memory_space<vmem>>, vector<2x8x19xf32>
    tpu.vector_store %arg7[%c0_2, %c0_3, %c307], %0 {strides = array<i32>} : memref<2x8x384xf32, #tpu.memory_space<vmem>>, vector<2x8x19xf32>,
    %3 = tpu.iota {dimensions = array<i32: 1>} : vector<1x288xi32>
    %c19_i32 = arith.constant 19 : i32
    %4 = vector.broadcast %c19_i32 : i32 to vector<1x288xi32>
    %5 = arith.addi %3, %4 : vector<1x288xi32>
    %c18_i32 = arith.constant 18 : i32
    %c0_i32 = arith.constant 0 : i32
    %6 = arith.cmpi eq, %c18_i32, %c0_i32 : i32
    %c1_i32 = arith.constant 1 : i32
    %7 = arith.select %6, %c1_i32, %c18_i32 : i32
    %8 = vector.broadcast %7 : i32 to vector<1x288xi32>
    %9 = arith.remsi %5, %8 : vector<1x288xi32>
    %c0_i32_4 = arith.constant 0 : i32
    %10 = vector.broadcast %c0_i32_4 : i32 to vector<1x288xi32>
    %11 = arith.cmpi ne, %9, %10 : vector<1x288xi32>
    %c0_i32_5 = arith.constant 0 : i32
    %12 = vector.broadcast %c0_i32_5 : i32 to vector<1x288xi32>
    %13 = arith.cmpi slt, %9, %12 : vector<1x288xi32>
    %c0_i32_6 = arith.constant 0 : i32
    %14 = arith.cmpi slt, %7, %c0_i32_6 : i32
    %15 = vector.broadcast %14 : i1 to vector<1x288xi1>
    %16 = vector.broadcast %15 : vector<1x288xi1> to vector<1x288xi1>
    %17 = arith.xori %13, %16 : vector<1x288xi1>
    %18 = arith.andi %17, %11 : vector<1x288xi1>
    %19 = vector.broadcast %7 : i32 to vector<1x288xi32>
    %20 = arith.addi %9, %19 : vector<1x288xi32>
    %21 = arith.select %18, %20, %9 : vector<1x288xi1>, vector<1x288xi32>
    %c1_i32_7 = arith.constant 1 : i32
    %22 = vector.broadcast %c1_i32_7 : i32 to vector<1x288xi32>
    %23 = arith.cmpi sge, %21, %22 : vector<1x288xi32>
    %c16_i32 = arith.constant 16 : i32
    %24 = vector.broadcast %c16_i32 : i32 to vector<1x288xi32>
    %25 = arith.cmpi sle, %21, %24 : vector<1x288xi32>
    %26 = arith.andi %23, %25 : vector<1x288xi1>
    %c0_8 = arith.constant 0 : index
    %27 = memref.load %arg2[%c0_8] : memref<36xf32, #tpu.memory_space<smem>>
    %c1 = arith.constant 1 : index
    %28 = memref.load %arg2[%c1] : memref<36xf32, #tpu.memory_space<smem>>
    %c2 = arith.constant 2 : index
    %29 = memref.load %arg2[%c2] : memref<36xf32, #tpu.memory_space<smem>>
    %c3 = arith.constant 3 : index
    %30 = memref.load %arg2[%c3] : memref<36xf32, #tpu.memory_space<smem>>
    %c4 = arith.constant 4 : index
    %31 = memref.load %arg2[%c4] : memref<36xf32, #tpu.memory_space<smem>>
    %c5 = arith.constant 5 : index
    %32 = memref.load %arg2[%c5] : memref<36xf32, #tpu.memory_space<smem>>
    %c6 = arith.constant 6 : index
    %33 = memref.load %arg2[%c6] : memref<36xf32, #tpu.memory_space<smem>>
    %c7 = arith.constant 7 : index
    %34 = memref.load %arg2[%c7] : memref<36xf32, #tpu.memory_space<smem>>
    %c8 = arith.constant 8 : index
    %35 = memref.load %arg2[%c8] : memref<36xf32, #tpu.memory_space<smem>>
    %c9 = arith.constant 9 : index
    %36 = memref.load %arg2[%c9] : memref<36xf32, #tpu.memory_space<smem>>
    %c10 = arith.constant 10 : index
    %37 = memref.load %arg2[%c10] : memref<36xf32, #tpu.memory_space<smem>>
    %c11 = arith.constant 11 : index
    %38 = memref.load %arg2[%c11] : memref<36xf32, #tpu.memory_space<smem>>
    %c12 = arith.constant 12 : index
    %39 = memref.load %arg2[%c12] : memref<36xf32, #tpu.memory_space<smem>>
    %c13 = arith.constant 13 : index
    %40 = memref.load %arg2[%c13] : memref<36xf32, #tpu.memory_space<smem>>
    %c14 = arith.constant 14 : index
    %41 = memref.load %arg2[%c14] : memref<36xf32, #tpu.memory_space<smem>>
    %c15 = arith.constant 15 : index
    %42 = memref.load %arg2[%c15] : memref<36xf32, #tpu.memory_space<smem>>
    %c16 = arith.constant 16 : index
    %43 = memref.load %arg2[%c16] : memref<36xf32, #tpu.memory_space<smem>>
    %c17 = arith.constant 17 : index
    %44 = memref.load %arg2[%c17] : memref<36xf32, #tpu.memory_space<smem>>
    %c18 = arith.constant 18 : index
    %45 = memref.load %arg2[%c18] : memref<36xf32, #tpu.memory_space<smem>>
    %c19 = arith.constant 19 : index
    %46 = memref.load %arg2[%c19] : memref<36xf32, #tpu.memory_space<smem>>
    %c20 = arith.constant 20 : index
    %47 = memref.load %arg2[%c20] : memref<36xf32, #tpu.memory_space<smem>>
    %c21 = arith.constant 21 : index
    %48 = memref.load %arg2[%c21] : memref<36xf32, #tpu.memory_space<smem>>
    %c22 = arith.constant 22 : index
    %49 = memref.load %arg2[%c22] : memref<36xf32, #tpu.memory_space<smem>>
    %c23 = arith.constant 23 : index
    %50 = memref.load %arg2[%c23] : memref<36xf32, #tpu.memory_space<smem>>
    %c24 = arith.constant 24 : index
    %51 = memref.load %arg2[%c24] : memref<36xf32, #tpu.memory_space<smem>>
    %c25 = arith.constant 25 : index
    %52 = memref.load %arg2[%c25] : memref<36xf32, #tpu.memory_space<smem>>
    %c26 = arith.constant 26 : index
    %53 = memref.load %arg2[%c26] : memref<36xf32, #tpu.memory_space<smem>>
    %c27 = arith.constant 27 : index
    %54 = memref.load %arg2[%c27] : memref<36xf32, #tpu.memory_space<smem>>
    %c28 = arith.constant 28 : index
    %55 = memref.load %arg2[%c28] : memref<36xf32, #tpu.memory_space<smem>>
    %c29 = arith.constant 29 : index
    %56 = memref.load %arg2[%c29] : memref<36xf32, #tpu.memory_space<smem>>
    %c30 = arith.constant 30 : index
    %57 = memref.load %arg2[%c30] : memref<36xf32, #tpu.memory_space<smem>>
    %c31 = arith.constant 31 : index
    %58 = memref.load %arg2[%c31] : memref<36xf32, #tpu.memory_space<smem>>
    %c32 = arith.constant 32 : index
    %59 = memref.load %arg2[%c32] : memref<36xf32, #tpu.memory_space<smem>>
    %c33 = arith.constant 33 : index
    %60 = memref.load %arg2[%c33] : memref<36xf32, #tpu.memory_space<smem>>
    %c34 = arith.constant 34 : index
    %61 = memref.load %arg2[%c34] : memref<36xf32, #tpu.memory_space<smem>>
    %c35 = arith.constant 35 : index
    %62 = memref.load %arg2[%c35] : memref<36xf32, #tpu.memory_space<smem>>
    %c0_9 = arith.constant 0 : index
    %63 = memref.load %arg4[%c0_9] : memref<36xf32, #tpu.memory_space<smem>>
    %c1_10 = arith.constant 1 : index
    %64 = memref.load %arg4[%c1_10] : memref<36xf32, #tpu.memory_space<smem>>
    %c2_11 = arith.constant 2 : index
    %65 = memref.load %arg4[%c2_11] : memref<36xf32, #tpu.memory_space<smem>>
    %c3_12 = arith.constant 3 : index
    %66 = memref.load %arg4[%c3_12] : memref<36xf32, #tpu.memory_space<smem>>
    %c4_13 = arith.constant 4 : index
    %67 = memref.load %arg4[%c4_13] : memref<36xf32, #tpu.memory_space<smem>>
    %c5_14 = arith.constant 5 : index
    %68 = memref.load %arg4[%c5_14] : memref<36xf32, #tpu.memory_space<smem>>
    %c6_15 = arith.constant 6 : index
    %69 = memref.load %arg4[%c6_15] : memref<36xf32, #tpu.memory_space<smem>>
    %c7_16 = arith.constant 7 : index
    %70 = memref.load %arg4[%c7_16] : memref<36xf32, #tpu.memory_space<smem>>
    %c8_17 = arith.constant 8 : index
    %71 = memref.load %arg4[%c8_17] : memref<36xf32, #tpu.memory_space<smem>>
    %c9_18 = arith.constant 9 : index
    %72 = memref.load %arg4[%c9_18] : memref<36xf32, #tpu.memory_space<smem>>
    %c10_19 = arith.constant 10 : index
    %73 = memref.load %arg4[%c10_19] : memref<36xf32, #tpu.memory_space<smem>>
    %c11_20 = arith.constant 11 : index
    %74 = memref.load %arg4[%c11_20] : memref<36xf32, #tpu.memory_space<smem>>
    %c12_21 = arith.constant 12 : index
    %75 = memref.load %arg4[%c12_21] : memref<36xf32, #tpu.memory_space<smem>>
    %c13_22 = arith.constant 13 : index
    %76 = memref.load %arg4[%c13_22] : memref<36xf32, #tpu.memory_space<smem>>
    %c14_23 = arith.constant 14 : index
    %77 = memref.load %arg4[%c14_23] : memref<36xf32, #tpu.memory_space<smem>>
    %c15_24 = arith.constant 15 : index
    %78 = memref.load %arg4[%c15_24] : memref<36xf32, #tpu.memory_space<smem>>
    %c16_25 = arith.constant 16 : index
    %79 = memref.load %arg4[%c16_25] : memref<36xf32, #tpu.memory_space<smem>>
    %c17_26 = arith.constant 17 : index
    %80 = memref.load %arg4[%c17_26] : memref<36xf32, #tpu.memory_space<smem>>
    %c18_27 = arith.constant 18 : index
    %81 = memref.load %arg4[%c18_27] : memref<36xf32, #tpu.memory_space<smem>>
    %c19_28 = arith.constant 19 : index
    %82 = memref.load %arg4[%c19_28] : memref<36xf32, #tpu.memory_space<smem>>
    %c20_29 = arith.constant 20 : index
    %83 = memref.load %arg4[%c20_29] : memref<36xf32, #tpu.memory_space<smem>>
    %c21_30 = arith.constant 21 : index
    %84 = memref.load %arg4[%c21_30] : memref<36xf32, #tpu.memory_space<smem>>
    %c22_31 = arith.constant 22 : index
    %85 = memref.load %arg4[%c22_31] : memref<36xf32, #tpu.memory_space<smem>>
    %c23_32 = arith.constant 23 : index
    %86 = memref.load %arg4[%c23_32] : memref<36xf32, #tpu.memory_space<smem>>
    %c24_33 = arith.constant 24 : index
    %87 = memref.load %arg4[%c24_33] : memref<36xf32, #tpu.memory_space<smem>>
    %c25_34 = arith.constant 25 : index
    %88 = memref.load %arg4[%c25_34] : memref<36xf32, #tpu.memory_space<smem>>
    %c26_35 = arith.constant 26 : index
    %89 = memref.load %arg4[%c26_35] : memref<36xf32, #tpu.memory_space<smem>>
    %c27_36 = arith.constant 27 : index
    %90 = memref.load %arg4[%c27_36] : memref<36xf32, #tpu.memory_space<smem>>
    %c28_37 = arith.constant 28 : index
    %91 = memref.load %arg4[%c28_37] : memref<36xf32, #tpu.memory_space<smem>>
    %c29_38 = arith.constant 29 : index
    %92 = memref.load %arg4[%c29_38] : memref<36xf32, #tpu.memory_space<smem>>
    %c30_39 = arith.constant 30 : index
    %93 = memref.load %arg4[%c30_39] : memref<36xf32, #tpu.memory_space<smem>>
    %c31_40 = arith.constant 31 : index
    %94 = memref.load %arg4[%c31_40] : memref<36xf32, #tpu.memory_space<smem>>
    %c32_41 = arith.constant 32 : index
    %95 = memref.load %arg4[%c32_41] : memref<36xf32, #tpu.memory_space<smem>>
    %c33_42 = arith.constant 33 : index
    %96 = memref.load %arg4[%c33_42] : memref<36xf32, #tpu.memory_space<smem>>
    %c34_43 = arith.constant 34 : index
    %97 = memref.load %arg4[%c34_43] : memref<36xf32, #tpu.memory_space<smem>>
    %c35_44 = arith.constant 35 : index
    %98 = memref.load %arg4[%c35_44] : memref<36xf32, #tpu.memory_space<smem>>
    %c0_45 = arith.constant 0 : index
    %99 = memref.load %arg3[%c0_45] : memref<2xf32, #tpu.memory_space<smem>>
    %c1_46 = arith.constant 1 : index
    %100 = memref.load %arg3[%c1_46] : memref<2xf32, #tpu.memory_space<smem>>
    %c0_47 = arith.constant 0 : index
    %101 = memref.load %arg5[%c0_47] : memref<2xf32, #tpu.memory_space<smem>>
    %c1_48 = arith.constant 1 : index
    %102 = memref.load %arg5[%c1_48] : memref<2xf32, #tpu.memory_space<smem>>
    %c0_49 = arith.constant 0 : index
    %c0_50 = arith.constant 0 : index
    %c19_51 = arith.constant 19 : index
    %103 = vector.load %arg1[%c0_49, %c0_50, %c19_51] : memref<4x8x384xf32, #tpu.memory_space<vmem>>, vector<1x8x288xf32>
    %104 = vector.shape_cast %103 : vector<1x8x288xf32> to vector<8x288xf32>
    %c1_52 = arith.constant 1 : index
    %c0_53 = arith.constant 0 : index
    %c19_54 = arith.constant 19 : index
    %105 = vector.load %arg1[%c1_52, %c0_53, %c19_54] : memref<4x8x384xf32, #tpu.memory_space<vmem>>, vector<1x8x288xf32>
    %106 = vector.shape_cast %105 : vector<1x8x288xf32> to vector<8x288xf32>
    %c2_55 = arith.constant 2 : index
    %c0_56 = arith.constant 0 : index
    %c19_57 = arith.constant 19 : index
    %107 = vector.load %arg1[%c2_55, %c0_56, %c19_57] : memref<4x8x384xf32, #tpu.memory_space<vmem>>, vector<1x8x288xf32>
    %108 = vector.shape_cast %107 : vector<1x8x288xf32> to vector<8x288xf32>
    %c3_58 = arith.constant 3 : index
    %c0_59 = arith.constant 0 : index
    %c19_60 = arith.constant 19 : index
    %109 = vector.load %arg1[%c3_58, %c0_59, %c19_60] : memref<4x8x384xf32, #tpu.memory_space<vmem>>, vector<1x8x288xf32>
    %110 = vector.shape_cast %109 : vector<1x8x288xf32> to vector<8x288xf32>
    %111 = vector.broadcast %99 : f32 to vector<8x288xf32>
    %112 = arith.addf %104, %111 : vector<8x288xf32>
    %113 = vector.broadcast %100 : f32 to vector<8x288xf32>
    %114 = arith.addf %106, %113 : vector<8x288xf32>
    %c2_61 = arith.constant 2 : index
    %c0_62 = arith.constant 0 : index
    %c0_63 = arith.constant 0 : index
    %115 = vector.load %arg1[%c2_61, %c0_62, %c0_63] : memref<4x8x384xf32, #tpu.memory_space<vmem>>, vector<1x8x288xf32>
    %116 = vector.shape_cast %115 : vector<1x8x288xf32> to vector<8x288xf32>
    %c2_64 = arith.constant 2 : index
    %c0_65 = arith.constant 0 : index
    %c1_66 = arith.constant 1 : index
    %117 = vector.load %arg1[%c2_64, %c0_65, %c1_66] : memref<4x8x384xf32, #tpu.memory_space<vmem>>, vector<1x8x288xf32>
    %118 = vector.shape_cast %117 : vector<1x8x288xf32> to vector<8x288xf32>
    %c2_67 = arith.constant 2 : index
    %c0_68 = arith.constant 0 : index
    %c2_69 = arith.constant 2 : index
    %119 = vector.load %arg1[%c2_67, %c0_68, %c2_69] : memref<4x8x384xf32, #tpu.memory_space<vmem>>, vector<1x8x288xf32>
    %120 = vector.shape_cast %119 : vector<1x8x288xf32> to vector<8x288xf32>
    %c2_70 = arith.constant 2 : index
    %c0_71 = arith.constant 0 : index
    %c18_72 = arith.constant 18 : index
    %121 = vector.load %arg1[%c2_70, %c0_71, %c18_72] : memref<4x8x384xf32, #tpu.memory_space<vmem>>, vector<1x8x288xf32>
    %122 = vector.shape_cast %121 : vector<1x8x288xf32> to vector<8x288xf32>
    %c2_73 = arith.constant 2 : index
    %c0_74 = arith.constant 0 : index
    %c19_75 = arith.constant 19 : index
    %123 = vector.load %arg1[%c2_73, %c0_74, %c19_75] : memref<4x8x384xf32, #tpu.memory_space<vmem>>, vector<1x8x288xf32>
    %124 = vector.shape_cast %123 : vector<1x8x288xf32> to vector<8x288xf32>
    %c2_76 = arith.constant 2 : index
    %c0_77 = arith.constant 0 : index
    %c20_78 = arith.constant 20 : index
    %125 = vector.load %arg1[%c2_76, %c0_77, %c20_78] : memref<4x8x384xf32, #tpu.memory_space<vmem>>, vector<1x8x288xf32>
    %126 = vector.shape_cast %125 : vector<1x8x288xf32> to vector<8x288xf32>
    %c2_79 = arith.constant 2 : index
    %c0_80 = arith.constant 0 : index
    %c36 = arith.constant 36 : index
    %127 = vector.load %arg1[%c2_79, %c0_80, %c36] : memref<4x8x384xf32, #tpu.memory_space<vmem>>, vector<1x8x288xf32>
    %128 = vector.shape_cast %127 : vector<1x8x288xf32> to vector<8x288xf32>
    %c2_81 = arith.constant 2 : index
    %c0_82 = arith.constant 0 : index
    %c37 = arith.constant 37 : index
    %129 = vector.load %arg1[%c2_81, %c0_82, %c37] : memref<4x8x384xf32, #tpu.memory_space<vmem>>, vector<1x8x288xf32>
    %130 = vector.shape_cast %129 : vector<1x8x288xf32> to vector<8x288xf32>
    %c2_83 = arith.constant 2 : index
    %c0_84 = arith.constant 0 : index
    %c38 = arith.constant 38 : index
    %131 = vector.load %arg1[%c2_83, %c0_84, %c38] : memref<4x8x384xf32, #tpu.memory_space<vmem>>, vector<1x8x288xf32>
    %132 = vector.shape_cast %131 : vector<1x8x288xf32> to vector<8x288xf32>
    %c3_85 = arith.constant 3 : index
    %c0_86 = arith.constant 0 : index
    %c0_87 = arith.constant 0 : index
    %133 = vector.load %arg1[%c3_85, %c0_86, %c0_87] : memref<4x8x384xf32, #tpu.memory_space<vmem>>, vector<1x8x288xf32>
    %134 = vector.shape_cast %133 : vector<1x8x288xf32> to vector<8x288xf32>
    %c3_88 = arith.constant 3 : index
    %c0_89 = arith.constant 0 : index
    %c1_90 = arith.constant 1 : index
    %135 = vector.load %arg1[%c3_88, %c0_89, %c1_90] : memref<4x8x384xf32, #tpu.memory_space<vmem>>, vector<1x8x288xf32>
    %136 = vector.shape_cast %135 : vector<1x8x288xf32> to vector<8x288xf32>
    %c3_91 = arith.constant 3 : index
    %c0_92 = arith.constant 0 : index
    %c2_93 = arith.constant 2 : index
    %137 = vector.load %arg1[%c3_91, %c0_92, %c2_93] : memref<4x8x384xf32, #tpu.memory_space<vmem>>, vector<1x8x288xf32>
    %138 = vector.shape_cast %137 : vector<1x8x288xf32> to vector<8x288xf32>
    %c3_94 = arith.constant 3 : index
    %c0_95 = arith.constant 0 : index
    %c18_96 = arith.constant 18 : index
    %139 = vector.load %arg1[%c3_94, %c0_95, %c18_96] : memref<4x8x384xf32, #tpu.memory_space<vmem>>, vector<1x8x288xf32>
    %140 = vector.shape_cast %139 : vector<1x8x288xf32> to vector<8x288xf32>
    %c3_97 = arith.constant 3 : index
    %c0_98 = arith.constant 0 : index
    %c19_99 = arith.constant 19 : index
    %141 = vector.load %arg1[%c3_97, %c0_98, %c19_99] : memref<4x8x384xf32, #tpu.memory_space<vmem>>, vector<1x8x288xf32>
    %142 = vector.shape_cast %141 : vector<1x8x288xf32> to vector<8x288xf32>
    %c3_100 = arith.constant 3 : index
    %c0_101 = arith.constant 0 : index
    %c20_102 = arith.constant 20 : index
    %143 = vector.load %arg1[%c3_100, %c0_101, %c20_102] : memref<4x8x384xf32, #tpu.memory_space<vmem>>, vector<1x8x288xf32>
    %144 = vector.shape_cast %143 : vector<1x8x288xf32> to vector<8x288xf32>
    %c3_103 = arith.constant 3 : index
    %c0_104 = arith.constant 0 : index
    %c36_105 = arith.constant 36 : index
    %145 = vector.load %arg1[%c3_103, %c0_104, %c36_105] : memref<4x8x384xf32, #tpu.memory_space<vmem>>, vector<1x8x288xf32>
    %146 = vector.shape_cast %145 : vector<1x8x288xf32> to vector<8x288xf32>
    %c3_106 = arith.constant 3 : index
    %c0_107 = arith.constant 0 : index
    %c37_108 = arith.constant 37 : index
    %147 = vector.load %arg1[%c3_106, %c0_107, %c37_108] : memref<4x8x384xf32, #tpu.memory_space<vmem>>, vector<1x8x288xf32>
    %148 = vector.shape_cast %147 : vector<1x8x288xf32> to vector<8x288xf32>
    %c3_109 = arith.constant 3 : index
    %c0_110 = arith.constant 0 : index
    %c38_111 = arith.constant 38 : index
    %149 = vector.load %arg1[%c3_109, %c0_110, %c38_111] : memref<4x8x384xf32, #tpu.memory_space<vmem>>, vector<1x8x288xf32>
    %150 = vector.shape_cast %149 : vector<1x8x288xf32> to vector<8x288xf32>
    %151 = vector.broadcast %27 : f32 to vector<8x288xf32>
    %152 = arith.mulf %151, %116 : vector<8x288xf32>
    %153 = arith.addf %112, %152 : vector<8x288xf32>
    %154 = vector.broadcast %28 : f32 to vector<8x288xf32>
    %155 = arith.mulf %154, %118 : vector<8x288xf32>
    %156 = arith.addf %153, %155 : vector<8x288xf32>
    %157 = vector.broadcast %29 : f32 to vector<8x288xf32>
    %158 = arith.mulf %157, %120 : vector<8x288xf32>
    %159 = arith.addf %156, %158 : vector<8x288xf32>
    %160 = vector.broadcast %30 : f32 to vector<8x288xf32>
    %161 = arith.mulf %160, %122 : vector<8x288xf32>
    %162 = arith.addf %159, %161 : vector<8x288xf32>
    %163 = vector.broadcast %31 : f32 to vector<8x288xf32>
    %164 = arith.mulf %163, %124 : vector<8x288xf32>
    %165 = arith.addf %162, %164 : vector<8x288xf32>
    %166 = vector.broadcast %32 : f32 to vector<8x288xf32>
    %167 = arith.mulf %166, %126 : vector<8x288xf32>
    %168 = arith.addf %165, %167 : vector<8x288xf32>
    %169 = vector.broadcast %33 : f32 to vector<8x288xf32>
    %170 = arith.mulf %169, %128 : vector<8x288xf32>
    %171 = arith.addf %168, %170 : vector<8x288xf32>
    %172 = vector.broadcast %34 : f32 to vector<8x288xf32>
    %173 = arith.mulf %172, %130 : vector<8x288xf32>
    %174 = arith.addf %171, %173 : vector<8x288xf32>
    %175 = vector.broadcast %35 : f32 to vector<8x288xf32>
    %176 = arith.mulf %175, %132 : vector<8x288xf32>
    %177 = arith.addf %174, %176 : vector<8x288xf32>
    %178 = vector.broadcast %36 : f32 to vector<8x288xf32>
    %179 = arith.mulf %178, %134 : vector<8x288xf32>
    %180 = arith.addf %177, %179 : vector<8x288xf32>
    %181 = vector.broadcast %37 : f32 to vector<8x288xf32>
    %182 = arith.mulf %181, %136 : vector<8x288xf32>
    %183 = arith.addf %180, %182 : vector<8x288xf32>
    %184 = vector.broadcast %38 : f32 to vector<8x288xf32>
    %185 = arith.mulf %184, %138 : vector<8x288xf32>
    %186 = arith.addf %183, %185 : vector<8x288xf32>
    %187 = vector.broadcast %39 : f32 to vector<8x288xf32>
    %188 = arith.mulf %187, %140 : vector<8x288xf32>
    %189 = arith.addf %186, %188 : vector<8x288xf32>
    %190 = vector.broadcast %40 : f32 to vector<8x288xf32>
    %191 = arith.mulf %190, %142 : vector<8x288xf32>
    %192 = arith.addf %189, %191 : vector<8x288xf32>
    %193 = vector.broadcast %41 : f32 to vector<8x288xf32>
    %194 = arith.mulf %193, %144 : vector<8x288xf32>
    %195 = arith.addf %192, %194 : vector<8x288xf32>
    %196 = vector.broadcast %42 : f32 to vector<8x288xf32>
    %197 = arith.mulf %196, %146 : vector<8x288xf32>
    %198 = arith.addf %195, %197 : vector<8x288xf32>
    %199 = vector.broadcast %43 : f32 to vector<8x288xf32>
    %200 = arith.mulf %199, %148 : vector<8x288xf32>
    %201 = arith.addf %198, %200 : vector<8x288xf32>
    %202 = vector.broadcast %44 : f32 to vector<8x288xf32>
    %203 = arith.mulf %202, %150 : vector<8x288xf32>
    %204 = arith.addf %201, %203 : vector<8x288xf32>
    %205 = vector.broadcast %45 : f32 to vector<8x288xf32>
    %206 = arith.mulf %205, %116 : vector<8x288xf32>
    %207 = arith.addf %114, %206 : vector<8x288xf32>
    %208 = vector.broadcast %46 : f32 to vector<8x288xf32>
    %209 = arith.mulf %208, %118 : vector<8x288xf32>
    %210 = arith.addf %207, %209 : vector<8x288xf32>
    %211 = vector.broadcast %47 : f32 to vector<8x288xf32>
    %212 = arith.mulf %211, %120 : vector<8x288xf32>
    %213 = arith.addf %210, %212 : vector<8x288xf32>
    %214 = vector.broadcast %48 : f32 to vector<8x288xf32>
    %215 = arith.mulf %214, %122 : vector<8x288xf32>
    %216 = arith.addf %213, %215 : vector<8x288xf32>
    %217 = vector.broadcast %49 : f32 to vector<8x288xf32>
    %218 = arith.mulf %217, %124 : vector<8x288xf32>
    %219 = arith.addf %216, %218 : vector<8x288xf32>
    %220 = vector.broadcast %50 : f32 to vector<8x288xf32>
    %221 = arith.mulf %220, %126 : vector<8x288xf32>
    %222 = arith.addf %219, %221 : vector<8x288xf32>
    %223 = vector.broadcast %51 : f32 to vector<8x288xf32>
    %224 = arith.mulf %223, %128 : vector<8x288xf32>
    %225 = arith.addf %222, %224 : vector<8x288xf32>
    %226 = vector.broadcast %52 : f32 to vector<8x288xf32>
    %227 = arith.mulf %226, %130 : vector<8x288xf32>
    %228 = arith.addf %225, %227 : vector<8x288xf32>
    %229 = vector.broadcast %53 : f32 to vector<8x288xf32>
    %230 = arith.mulf %229, %132 : vector<8x288xf32>
    %231 = arith.addf %228, %230 : vector<8x288xf32>
    %232 = vector.broadcast %54 : f32 to vector<8x288xf32>
    %233 = arith.mulf %232, %134 : vector<8x288xf32>
    %234 = arith.addf %231, %233 : vector<8x288xf32>
    %235 = vector.broadcast %55 : f32 to vector<8x288xf32>
    %236 = arith.mulf %235, %136 : vector<8x288xf32>
    %237 = arith.addf %234, %236 : vector<8x288xf32>
    %238 = vector.broadcast %56 : f32 to vector<8x288xf32>
    %239 = arith.mulf %238, %138 : vector<8x288xf32>
    %240 = arith.addf %237, %239 : vector<8x288xf32>
    %241 = vector.broadcast %57 : f32 to vector<8x288xf32>
    %242 = arith.mulf %241, %140 : vector<8x288xf32>
    %243 = arith.addf %240, %242 : vector<8x288xf32>
    %244 = vector.broadcast %58 : f32 to vector<8x288xf32>
    %245 = arith.mulf %244, %142 : vector<8x288xf32>
    %246 = arith.addf %243, %245 : vector<8x288xf32>
    %247 = vector.broadcast %59 : f32 to vector<8x288xf32>
    %248 = arith.mulf %247, %144 : vector<8x288xf32>
    %249 = arith.addf %246, %248 : vector<8x288xf32>
    %250 = vector.broadcast %60 : f32 to vector<8x288xf32>
    %251 = arith.mulf %250, %146 : vector<8x288xf32>
    %252 = arith.addf %249, %251 : vector<8x288xf32>
    %253 = vector.broadcast %61 : f32 to vector<8x288xf32>
    %254 = arith.mulf %253, %148 : vector<8x288xf32>
    %255 = arith.addf %252, %254 : vector<8x288xf32>
    %256 = vector.broadcast %62 : f32 to vector<8x288xf32>
    %257 = arith.mulf %256, %150 : vector<8x288xf32>
    %258 = arith.addf %255, %257 : vector<8x288xf32>
    %c0_112 = arith.constant 0 : index
    %c0_113 = arith.constant 0 : index
    %c19_114 = arith.constant 19 : index
    %259 = vector.load %arg6[%c0_112, %c0_113, %c19_114] : memref<4x8x384xf32, #tpu.memory_space<vmem>>, vector<1x8x288xf32>
    %260 = vector.shape_cast %259 : vector<1x8x288xf32> to vector<8x288xf32>
    %261 = vector.shape_cast %204 : vector<8x288xf32> to vector<1x8x288xf32>
    tpu.vector_store %arg6[%c0_112, %c0_113, %c19_114], %261 {strides = array<i32>} : memref<4x8x384xf32, #tpu.memory_space<vmem>>, vector<1x8x288xf32>,
    %cst_115 = arith.constant 0.000000e+00 : f32
    %262 = vector.shape_cast %26 : vector<1x288xi1> to vector<1x288xi1>
    %263 = vector.broadcast %262 : vector<1x288xi1> to vector<8x288xi1>
    %264 = vector.broadcast %cst_115 : f32 to vector<8x288xf32>
    %265 = arith.select %263, %204, %264 : vector<8x288xi1>, vector<8x288xf32>
    %c0_116 = arith.constant 0 : index
    %c0_117 = arith.constant 0 : index
    %c19_118 = arith.constant 19 : index
    %266 = vector.load %arg7[%c0_116, %c0_117, %c19_118] : memref<2x8x384xf32, #tpu.memory_space<vmem>>, vector<1x8x288xf32>
    %267 = vector.shape_cast %266 : vector<1x8x288xf32> to vector<8x288xf32>
    %268 = vector.shape_cast %265 : vector<8x288xf32> to vector<1x8x288xf32>
    tpu.vector_store %arg7[%c0_116, %c0_117, %c19_118], %268 {strides = array<i32>} : memref<2x8x384xf32, #tpu.memory_space<vmem>>, vector<1x8x288xf32>,
    %c1_119 = arith.constant 1 : index
    %c0_120 = arith.constant 0 : index
    %c19_121 = arith.constant 19 : index
    %269 = vector.load %arg6[%c1_119, %c0_120, %c19_121] : memref<4x8x384xf32, #tpu.memory_space<vmem>>, vector<1x8x288xf32>
    %270 = vector.shape_cast %269 : vector<1x8x288xf32> to vector<8x288xf32>
    %271 = vector.shape_cast %258 : vector<8x288xf32> to vector<1x8x288xf32>
    tpu.vector_store %arg6[%c1_119, %c0_120, %c19_121], %271 {strides = array<i32>} : memref<4x8x384xf32, #tpu.memory_space<vmem>>, vector<1x8x288xf32>,
    %cst_122 = arith.constant 0.000000e+00 : f32
    %272 = vector.shape_cast %26 : vector<1x288xi1> to vector<1x288xi1>
    %273 = vector.broadcast %272 : vector<1x288xi1> to vector<8x288xi1>
    %274 = vector.broadcast %cst_122 : f32 to vector<8x288xf32>
    %275 = arith.select %273, %258, %274 : vector<8x288xi1>, vector<8x288xf32>
    %c1_123 = arith.constant 1 : index
    %c0_124 = arith.constant 0 : index
    %c19_125 = arith.constant 19 : index
    %276 = vector.load %arg7[%c1_123, %c0_124, %c19_125] : memref<2x8x384xf32, #tpu.memory_space<vmem>>, vector<1x8x288xf32>
    %277 = vector.shape_cast %276 : vector<1x8x288xf32> to vector<8x288xf32>
    %278 = vector.shape_cast %275 : vector<8x288xf32> to vector<1x8x288xf32>
    tpu.vector_store %arg7[%c1_123, %c0_124, %c19_125], %278 {strides = array<i32>} : memref<2x8x384xf32, #tpu.memory_space<vmem>>, vector<1x8x288xf32>,
    %279 = vector.broadcast %101 : f32 to vector<8x288xf32>
    %280 = arith.addf %108, %279 : vector<8x288xf32>
    %281 = vector.broadcast %102 : f32 to vector<8x288xf32>
    %282 = arith.addf %110, %281 : vector<8x288xf32>
    %c0_126 = arith.constant 0 : index
    %c0_127 = arith.constant 0 : index
    %c0_128 = arith.constant 0 : index
    %283 = vector.load %arg7[%c0_126, %c0_127, %c0_128] : memref<2x8x384xf32, #tpu.memory_space<vmem>>, vector<1x8x288xf32>
    %284 = vector.shape_cast %283 : vector<1x8x288xf32> to vector<8x288xf32>
    %c0_129 = arith.constant 0 : index
    %c0_130 = arith.constant 0 : index
    %c1_131 = arith.constant 1 : index
    %285 = vector.load %arg7[%c0_129, %c0_130, %c1_131] : memref<2x8x384xf32, #tpu.memory_space<vmem>>, vector<1x8x288xf32>
    %286 = vector.shape_cast %285 : vector<1x8x288xf32> to vector<8x288xf32>
    %c0_132 = arith.constant 0 : index
    %c0_133 = arith.constant 0 : index
    %c2_134 = arith.constant 2 : index
    %287 = vector.load %arg7[%c0_132, %c0_133, %c2_134] : memref<2x8x384xf32, #tpu.memory_space<vmem>>, vector<1x8x288xf32>
    %288 = vector.shape_cast %287 : vector<1x8x288xf32> to vector<8x288xf32>
    %c0_135 = arith.constant 0 : index
    %c0_136 = arith.constant 0 : index
    %c18_137 = arith.constant 18 : index
    %289 = vector.load %arg7[%c0_135, %c0_136, %c18_137] : memref<2x8x384xf32, #tpu.memory_space<vmem>>, vector<1x8x288xf32>
    %290 = vector.shape_cast %289 : vector<1x8x288xf32> to vector<8x288xf32>
    %c0_138 = arith.constant 0 : index
    %c0_139 = arith.constant 0 : index
    %c19_140 = arith.constant 19 : index
    %291 = vector.load %arg7[%c0_138, %c0_139, %c19_140] : memref<2x8x384xf32, #tpu.memory_space<vmem>>, vector<1x8x288xf32>
    %292 = vector.shape_cast %291 : vector<1x8x288xf32> to vector<8x288xf32>
    %c0_141 = arith.constant 0 : index
    %c0_142 = arith.constant 0 : index
    %c20_143 = arith.constant 20 : index
    %293 = vector.load %arg7[%c0_141, %c0_142, %c20_143] : memref<2x8x384xf32, #tpu.memory_space<vmem>>, vector<1x8x288xf32>
    %294 = vector.shape_cast %293 : vector<1x8x288xf32> to vector<8x288xf32>
    %c0_144 = arith.constant 0 : index
    %c0_145 = arith.constant 0 : index
    %c36_146 = arith.constant 36 : index
    %295 = vector.load %arg7[%c0_144, %c0_145, %c36_146] : memref<2x8x384xf32, #tpu.memory_space<vmem>>, vector<1x8x288xf32>
    %296 = vector.shape_cast %295 : vector<1x8x288xf32> to vector<8x288xf32>
    %c0_147 = arith.constant 0 : index
    %c0_148 = arith.constant 0 : index
    %c37_149 = arith.constant 37 : index
    %297 = vector.load %arg7[%c0_147, %c0_148, %c37_149] : memref<2x8x384xf32, #tpu.memory_space<vmem>>, vector<1x8x288xf32>
    %298 = vector.shape_cast %297 : vector<1x8x288xf32> to vector<8x288xf32>
    %c0_150 = arith.constant 0 : index
    %c0_151 = arith.constant 0 : index
    %c38_152 = arith.constant 38 : index
    %299 = vector.load %arg7[%c0_150, %c0_151, %c38_152] : memref<2x8x384xf32, #tpu.memory_space<vmem>>, vector<1x8x288xf32>
    %300 = vector.shape_cast %299 : vector<1x8x288xf32> to vector<8x288xf32>
    %c1_153 = arith.constant 1 : index
    %c0_154 = arith.constant 0 : index
    %c0_155 = arith.constant 0 : index
    %301 = vector.load %arg7[%c1_153, %c0_154, %c0_155] : memref<2x8x384xf32, #tpu.memory_space<vmem>>, vector<1x8x288xf32>
    %302 = vector.shape_cast %301 : vector<1x8x288xf32> to vector<8x288xf32>
    %c1_156 = arith.constant 1 : index
    %c0_157 = arith.constant 0 : index
    %c1_158 = arith.constant 1 : index
    %303 = vector.load %arg7[%c1_156, %c0_157, %c1_158] : memref<2x8x384xf32, #tpu.memory_space<vmem>>, vector<1x8x288xf32>
    %304 = vector.shape_cast %303 : vector<1x8x288xf32> to vector<8x288xf32>
    %c1_159 = arith.constant 1 : index
    %c0_160 = arith.constant 0 : index
    %c2_161 = arith.constant 2 : index
    %305 = vector.load %arg7[%c1_159, %c0_160, %c2_161] : memref<2x8x384xf32, #tpu.memory_space<vmem>>, vector<1x8x288xf32>
    %306 = vector.shape_cast %305 : vector<1x8x288xf32> to vector<8x288xf32>
    %c1_162 = arith.constant 1 : index
    %c0_163 = arith.constant 0 : index
    %c18_164 = arith.constant 18 : index
    %307 = vector.load %arg7[%c1_162, %c0_163, %c18_164] : memref<2x8x384xf32, #tpu.memory_space<vmem>>, vector<1x8x288xf32>
    %308 = vector.shape_cast %307 : vector<1x8x288xf32> to vector<8x288xf32>
    %c1_165 = arith.constant 1 : index
    %c0_166 = arith.constant 0 : index
    %c19_167 = arith.constant 19 : index
    %309 = vector.load %arg7[%c1_165, %c0_166, %c19_167] : memref<2x8x384xf32, #tpu.memory_space<vmem>>, vector<1x8x288xf32>
    %310 = vector.shape_cast %309 : vector<1x8x288xf32> to vector<8x288xf32>
    %c1_168 = arith.constant 1 : index
    %c0_169 = arith.constant 0 : index
    %c20_170 = arith.constant 20 : index
    %311 = vector.load %arg7[%c1_168, %c0_169, %c20_170] : memref<2x8x384xf32, #tpu.memory_space<vmem>>, vector<1x8x288xf32>
    %312 = vector.shape_cast %311 : vector<1x8x288xf32> to vector<8x288xf32>
    %c1_171 = arith.constant 1 : index
    %c0_172 = arith.constant 0 : index
    %c36_173 = arith.constant 36 : index
    %313 = vector.load %arg7[%c1_171, %c0_172, %c36_173] : memref<2x8x384xf32, #tpu.memory_space<vmem>>, vector<1x8x288xf32>
    %314 = vector.shape_cast %313 : vector<1x8x288xf32> to vector<8x288xf32>
    %c1_174 = arith.constant 1 : index
    %c0_175 = arith.constant 0 : index
    %c37_176 = arith.constant 37 : index
    %315 = vector.load %arg7[%c1_174, %c0_175, %c37_176] : memref<2x8x384xf32, #tpu.memory_space<vmem>>, vector<1x8x288xf32>
    %316 = vector.shape_cast %315 : vector<1x8x288xf32> to vector<8x288xf32>
    %c1_177 = arith.constant 1 : index
    %c0_178 = arith.constant 0 : index
    %c38_179 = arith.constant 38 : index
    %317 = vector.load %arg7[%c1_177, %c0_178, %c38_179] : memref<2x8x384xf32, #tpu.memory_space<vmem>>, vector<1x8x288xf32>
    %318 = vector.shape_cast %317 : vector<1x8x288xf32> to vector<8x288xf32>
    %319 = vector.broadcast %63 : f32 to vector<8x288xf32>
    %320 = arith.mulf %319, %284 : vector<8x288xf32>
    %321 = arith.addf %280, %320 : vector<8x288xf32>
    %322 = vector.broadcast %64 : f32 to vector<8x288xf32>
    %323 = arith.mulf %322, %286 : vector<8x288xf32>
    %324 = arith.addf %321, %323 : vector<8x288xf32>
    %325 = vector.broadcast %65 : f32 to vector<8x288xf32>
    %326 = arith.mulf %325, %288 : vector<8x288xf32>
    %327 = arith.addf %324, %326 : vector<8x288xf32>
    %328 = vector.broadcast %66 : f32 to vector<8x288xf32>
    %329 = arith.mulf %328, %290 : vector<8x288xf32>
    %330 = arith.addf %327, %329 : vector<8x288xf32>
    %331 = vector.broadcast %67 : f32 to vector<8x288xf32>
    %332 = arith.mulf %331, %292 : vector<8x288xf32>
    %333 = arith.addf %330, %332 : vector<8x288xf32>
    %334 = vector.broadcast %68 : f32 to vector<8x288xf32>
    %335 = arith.mulf %334, %294 : vector<8x288xf32>
    %336 = arith.addf %333, %335 : vector<8x288xf32>
    %337 = vector.broadcast %69 : f32 to vector<8x288xf32>
    %338 = arith.mulf %337, %296 : vector<8x288xf32>
    %339 = arith.addf %336, %338 : vector<8x288xf32>
    %340 = vector.broadcast %70 : f32 to vector<8x288xf32>
    %341 = arith.mulf %340, %298 : vector<8x288xf32>
    %342 = arith.addf %339, %341 : vector<8x288xf32>
    %343 = vector.broadcast %71 : f32 to vector<8x288xf32>
    %344 = arith.mulf %343, %300 : vector<8x288xf32>
    %345 = arith.addf %342, %344 : vector<8x288xf32>
    %346 = vector.broadcast %72 : f32 to vector<8x288xf32>
    %347 = arith.mulf %346, %302 : vector<8x288xf32>
    %348 = arith.addf %345, %347 : vector<8x288xf32>
    %349 = vector.broadcast %73 : f32 to vector<8x288xf32>
    %350 = arith.mulf %349, %304 : vector<8x288xf32>
    %351 = arith.addf %348, %350 : vector<8x288xf32>
    %352 = vector.broadcast %74 : f32 to vector<8x288xf32>
    %353 = arith.mulf %352, %306 : vector<8x288xf32>
    %354 = arith.addf %351, %353 : vector<8x288xf32>
    %355 = vector.broadcast %75 : f32 to vector<8x288xf32>
    %356 = arith.mulf %355, %308 : vector<8x288xf32>
    %357 = arith.addf %354, %356 : vector<8x288xf32>
    %358 = vector.broadcast %76 : f32 to vector<8x288xf32>
    %359 = arith.mulf %358, %310 : vector<8x288xf32>
    %360 = arith.addf %357, %359 : vector<8x288xf32>
    %361 = vector.broadcast %77 : f32 to vector<8x288xf32>
    %362 = arith.mulf %361, %312 : vector<8x288xf32>
    %363 = arith.addf %360, %362 : vector<8x288xf32>
    %364 = vector.broadcast %78 : f32 to vector<8x288xf32>
    %365 = arith.mulf %364, %314 : vector<8x288xf32>
    %366 = arith.addf %363, %365 : vector<8x288xf32>
    %367 = vector.broadcast %79 : f32 to vector<8x288xf32>
    %368 = arith.mulf %367, %316 : vector<8x288xf32>
    %369 = arith.addf %366, %368 : vector<8x288xf32>
    %370 = vector.broadcast %80 : f32 to vector<8x288xf32>
    %371 = arith.mulf %370, %318 : vector<8x288xf32>
    %372 = arith.addf %369, %371 : vector<8x288xf32>
    %373 = vector.broadcast %81 : f32 to vector<8x288xf32>
    %374 = arith.mulf %373, %284 : vector<8x288xf32>
    %375 = arith.addf %282, %374 : vector<8x288xf32>
    %376 = vector.broadcast %82 : f32 to vector<8x288xf32>
    %377 = arith.mulf %376, %286 : vector<8x288xf32>
    %378 = arith.addf %375, %377 : vector<8x288xf32>
    %379 = vector.broadcast %83 : f32 to vector<8x288xf32>
    %380 = arith.mulf %379, %288 : vector<8x288xf32>
    %381 = arith.addf %378, %380 : vector<8x288xf32>
    %382 = vector.broadcast %84 : f32 to vector<8x288xf32>
    %383 = arith.mulf %382, %290 : vector<8x288xf32>
    %384 = arith.addf %381, %383 : vector<8x288xf32>
    %385 = vector.broadcast %85 : f32 to vector<8x288xf32>
    %386 = arith.mulf %385, %292 : vector<8x288xf32>
    %387 = arith.addf %384, %386 : vector<8x288xf32>
    %388 = vector.broadcast %86 : f32 to vector<8x288xf32>
    %389 = arith.mulf %388, %294 : vector<8x288xf32>
    %390 = arith.addf %387, %389 : vector<8x288xf32>
    %391 = vector.broadcast %87 : f32 to vector<8x288xf32>
    %392 = arith.mulf %391, %296 : vector<8x288xf32>
    %393 = arith.addf %390, %392 : vector<8x288xf32>
    %394 = vector.broadcast %88 : f32 to vector<8x288xf32>
    %395 = arith.mulf %394, %298 : vector<8x288xf32>
    %396 = arith.addf %393, %395 : vector<8x288xf32>
    %397 = vector.broadcast %89 : f32 to vector<8x288xf32>
    %398 = arith.mulf %397, %300 : vector<8x288xf32>
    %399 = arith.addf %396, %398 : vector<8x288xf32>
    %400 = vector.broadcast %90 : f32 to vector<8x288xf32>
    %401 = arith.mulf %400, %302 : vector<8x288xf32>
    %402 = arith.addf %399, %401 : vector<8x288xf32>
    %403 = vector.broadcast %91 : f32 to vector<8x288xf32>
    %404 = arith.mulf %403, %304 : vector<8x288xf32>
    %405 = arith.addf %402, %404 : vector<8x288xf32>
    %406 = vector.broadcast %92 : f32 to vector<8x288xf32>
    %407 = arith.mulf %406, %306 : vector<8x288xf32>
    %408 = arith.addf %405, %407 : vector<8x288xf32>
    %409 = vector.broadcast %93 : f32 to vector<8x288xf32>
    %410 = arith.mulf %409, %308 : vector<8x288xf32>
    %411 = arith.addf %408, %410 : vector<8x288xf32>
    %412 = vector.broadcast %94 : f32 to vector<8x288xf32>
    %413 = arith.mulf %412, %310 : vector<8x288xf32>
    %414 = arith.addf %411, %413 : vector<8x288xf32>
    %415 = vector.broadcast %95 : f32 to vector<8x288xf32>
    %416 = arith.mulf %415, %312 : vector<8x288xf32>
    %417 = arith.addf %414, %416 : vector<8x288xf32>
    %418 = vector.broadcast %96 : f32 to vector<8x288xf32>
    %419 = arith.mulf %418, %314 : vector<8x288xf32>
    %420 = arith.addf %417, %419 : vector<8x288xf32>
    %421 = vector.broadcast %97 : f32 to vector<8x288xf32>
    %422 = arith.mulf %421, %316 : vector<8x288xf32>
    %423 = arith.addf %420, %422 : vector<8x288xf32>
    %424 = vector.broadcast %98 : f32 to vector<8x288xf32>
    %425 = arith.mulf %424, %318 : vector<8x288xf32>
    %426 = arith.addf %423, %425 : vector<8x288xf32>
    %c2_180 = arith.constant 2 : index
    %c0_181 = arith.constant 0 : index
    %c19_182 = arith.constant 19 : index
    %427 = vector.load %arg6[%c2_180, %c0_181, %c19_182] : memref<4x8x384xf32, #tpu.memory_space<vmem>>, vector<1x8x288xf32>
    %428 = vector.shape_cast %427 : vector<1x8x288xf32> to vector<8x288xf32>
    %429 = vector.shape_cast %372 : vector<8x288xf32> to vector<1x8x288xf32>
    tpu.vector_store %arg6[%c2_180, %c0_181, %c19_182], %429 {strides = array<i32>} : memref<4x8x384xf32, #tpu.memory_space<vmem>>, vector<1x8x288xf32>,
    %c3_183 = arith.constant 3 : index
    %c0_184 = arith.constant 0 : index
    %c19_185 = arith.constant 19 : index
    %430 = vector.load %arg6[%c3_183, %c0_184, %c19_185] : memref<4x8x384xf32, #tpu.memory_space<vmem>>, vector<1x8x288xf32>
    %431 = vector.shape_cast %430 : vector<1x8x288xf32> to vector<8x288xf32>
    %432 = vector.shape_cast %426 : vector<8x288xf32> to vector<1x8x288xf32>
    tpu.vector_store %arg6[%c3_183, %c0_184, %c19_185], %432 {strides = array<i32>} : memref<4x8x384xf32, #tpu.memory_space<vmem>>, vector<1x8x288xf32>,
    return
  }
  func.func @transform_0(%arg0: i32) -> (i32, i32, i32) {
    %c0_i32 = arith.constant 0 : i32
    %c0_i32_0 = arith.constant 0 : i32
    %c0_i32_1 = arith.constant 0 : i32
    return %c0_i32, %arg0, %c0_i32_0 : i32, i32, i32
  }
  func.func @transform_1(%arg0: i32) -> i32 {
    %c0_i32 = arith.constant 0 : i32
    %c0_i32_0 = arith.constant 0 : i32
    return %c0_i32 : i32
  }
  func.func @transform_2(%arg0: i32) -> i32 {
    %c0_i32 = arith.constant 0 : i32
    %c0_i32_0 = arith.constant 0 : i32
    return %c0_i32 : i32
  }
  func.func @transform_3(%arg0: i32) -> i32 {
    %c0_i32 = arith.constant 0 : i32
    %c0_i32_0 = arith.constant 0 : i32
    return %c0_i32 : i32
  }
  func.func @transform_4(%arg0: i32) -> i32 {
    %c0_i32 = arith.constant 0 : i32
    %c0_i32_0 = arith.constant 0 : i32
    return %c0_i32 : i32
  }
  func.func @transform_5(%arg0: i32) -> (i32, i32, i32) {
    %c0_i32 = arith.constant 0 : i32
    %c0_i32_0 = arith.constant 0 : i32
    %c0_i32_1 = arith.constant 0 : i32
    return %c0_i32, %arg0, %c0_i32_0 : i32, i32, i32
  }
}

</mosaic_0001>

<llo_original>
// kernel: tpu_custom_call.1
$region0: #{tpu_custom_call.1}
  #allocation0 [shape = 'u32[]', space=smem, size = 0x4, offset = 0x4, fixed_abs, tag = 'smem constant byte address 0x4 - core index']
  #allocation1 [shape = 'u32[72,128]{1,0:T(1,128)}', space=vmem, size = 0x9000, scoped, tag = 'internal scratch']
  #allocation2 [shape = 'f32[2,8,384]{2,1,0:T(8,128)}', space=vmem, size = 0x6000, scoped, tag = 'scratch operand']
  %s0 = inlined_call_operand.hbm [shape: f32[4,16,384], index: 0, kind: input, shape index: {}]
  %s1 = inlined_call_operand.hbm [shape: f32[36], index: 1, kind: input, shape index: {}]
  %s2 = inlined_call_operand.vmem [shape: f32[2], index: 2, kind: input, shape index: {}]
  %s3 = inlined_call_operand.vmem [shape: f32[36], index: 3, kind: input, shape index: {}]
  %s4 = inlined_call_operand.vmem [shape: f32[2], index: 4, kind: input, shape index: {}]
  %s5 = inlined_call_operand.hbm [shape: f32[4,16,384], index: 5, kind: output, shape index: {}]
  %s6 = sld [smem:[#allocation0]]
  $region73: #{tpu_custom_call.1} parent=0
    _
  %s8 = ssub.s32 1, %s6
  %s9 = scalar_select 0, %s8, %s6
  $region1: #{tpu_custom_call.1} parent=0
    #allocation3 [shape = 'u8[98304]{0}', space=vmem, size = 0x18000, scoped, tag = 'input window, operand 0']
    #allocation4 [shape = 's32[2]{0}', space=sflag, size = 0x8, scoped, tag = 'scoped memory for tpu_custom_call.1']
    #allocation5 [shape = 's32[2]{0}', space=sflag, size = 0x8, scoped, tag = 'scoped memory for tpu_custom_call.1']
    #allocation6 [shape = 's32[2]{0}', space=sflag, size = 0x8, scoped, tag = 'scoped memory for tpu_custom_call.1']
    #allocation7 [shape = 's32[2]{0}', space=sflag, size = 0x8, scoped, tag = 'scoped memory for tpu_custom_call.1']
    #allocation8 [shape = 'u8[512]{0}', space=smem, size = 0x200, scoped, tag = 'input window, operand 1, single buffered']
    #allocation9 [shape = 'u8[512]{0}', space=smem, size = 0x200, scoped, tag = 'input window, operand 2, single buffered']
    #allocation10 [shape = 'u8[512]{0}', space=smem, size = 0x200, scoped, tag = 'input window, operand 3, single buffered']
    #allocation11 [shape = 's32[1]{0}', space=sflag, size = 0x4, scoped, tag = 'scoped memory for tpu_custom_call.1']
    #allocation12 [shape = 'u8[512]{0}', space=smem, size = 0x200, scoped, tag = 'input window, operand 4, single buffered']
    #allocation13 [shape = 'u8[98304]{0}', space=vmem, size = 0x18000, scoped, tag = 'output window, operand 0']
    %10 = vsyncpa [#allocation4], 0
    %s11 = scalar_lea.sflag [#allocation4], 1
    %12 = vsyncpa %s11, 0
    %13 = vsyncpa [#allocation6], 0
    %14 = vsyncpa [#allocation7], 0
    %15 = vsyncpa [#allocation11], 0
    %16 = vsyncpa [#allocation5], 0
    %s17 = scalar_lea.sflag [#allocation5], 1
    %18 = vsyncpa %s17, 0
    loop: start=0, step=1, limit=4
    $region2: #{tpu_custom_call.1} parent=1 // loop_pre_header
      _
    $region3: #{tpu_custom_call.1} parent=1 // loop_header
      %s20 = sphi 0, %s24
      %p21 = scmp.ge.s32.totalorder %s20, 4
      %s30 = sphi 0, %s32
      %s33 = sphi 0, %s30
      %s34 = sphi 0, %s33
      %s50 = sphi 0, %s34
      %s54 = sphi 0, %s54
      %s56 = sphi 0, %s54
      %s57 = sphi 0, %s56
      %s71 = sphi 0, %s57
      %s75 = sphi 0, %s75
      %s77 = sphi 0, %s75
      %s78 = sphi 0, %s77
      %s92 = sphi 0, %s78
      %s96 = sphi 0, %s96
      %s98 = sphi 0, %s96
      %s99 = sphi 0, %s98
      %s113 = sphi 0, %s99
      %s117 = sphi 0, %s117
      %s119 = sphi 0, %s117
      %s120 = sphi 0, %s119
      %s134 = sphi 0, %s120
      %s140 = sphi 0, %s142
      %s143 = sphi 0, %s140
      %s144 = sphi 0, %s143
      %s160 = sphi 0, %s144
    $region4: #{tpu_custom_call.1} parent=1 // loop_header_branch
      %23 = sbr.rel (%p21) target = $region8
    $region5: #{tpu_custom_call.1} parent=1 // loop_body
      %s25 = ssub.s32 %s20, 1
      %s26 = ssub.s32 %s20, 2
      %s27 = sadd.s32 %s20, 1
      %s28 = ssub.s32 %s20, %s27
      %p29 = scmp.eq.s32.totalorder %s28, 0
      %s31 = sadd.s32 %s30, 1
      %s32 = scalar_select %p29, %s30, %s31
      %p35 = pneg %p29
      %p36 = scmp.eq.s32.totalorder %s20, 1
      %p37 = por %p35, %p36
      %p38 = scmp.ne.s32.totalorder %s30, %s33
      %p39 = scmp.eq.s32.totalorder %s20, 0
      %p40 = por %p38, %p39
      %p41 = scmp.ne.s32.totalorder %s30, %s33
      %p42 = scmp.eq.s32.totalorder %s25, 1
      %p43 = por %p41, %p42
      %p44 = scmp.ne.s32.totalorder %s33, %s34
      %p45 = scmp.eq.s32.totalorder %s25, 0
      %p46 = por %p44, %p45
      %p47 = scmp.ne.s32.totalorder %s33, %s34
      %p48 = scmp.eq.s32.totalorder %s26, 1
      %p49 = por %p47, %p48
      %p51 = scmp.ne.s32.totalorder %s34, %s50
      %p52 = scmp.eq.s32.totalorder %s26, 0
      %p53 = por %p51, %p52
      %s55 = sadd.s32 %s54, 1
      %p58 = scmp.eq.s32.totalorder %s20, 1
      %p59 = scmp.ne.s32.totalorder %s54, %s56
      %p60 = scmp.eq.s32.totalorder %s20, 0
      %p61 = por %p59, %p60
      %p62 = scmp.ne.s32.totalorder %s54, %s56
      %p63 = scmp.eq.s32.totalorder %s25, 1
      %p64 = por %p62, %p63
      %p65 = scmp.ne.s32.totalorder %s56, %s57
      %p66 = scmp.eq.s32.totalorder %s25, 0
      %p67 = por %p65, %p66
      %p68 = scmp.ne.s32.totalorder %s56, %s57
      %p69 = scmp.eq.s32.totalorder %s26, 1
      %p70 = por %p68, %p69
      %p72 = scmp.ne.s32.totalorder %s57, %s71
      %p73 = scmp.eq.s32.totalorder %s26, 0
      %p74 = por %p72, %p73
      %s76 = sadd.s32 %s75, 1
      %p79 = scmp.eq.s32.totalorder %s20, 1
      %p80 = scmp.ne.s32.totalorder %s75, %s77
      %p81 = scmp.eq.s32.totalorder %s20, 0
      %p82 = por %p80, %p81
      %p83 = scmp.ne.s32.totalorder %s75, %s77
      %p84 = scmp.eq.s32.totalorder %s25, 1
      %p85 = por %p83, %p84
      %p86 = scmp.ne.s32.totalorder %s77, %s78
      %p87 = scmp.eq.s32.totalorder %s25, 0
      %p88 = por %p86, %p87
      %p89 = scmp.ne.s32.totalorder %s77, %s78
      %p90 = scmp.eq.s32.totalorder %s26, 1
      %p91 = por %p89, %p90
      %p93 = scmp.ne.s32.totalorder %s78, %s92
      %p94 = scmp.eq.s32.totalorder %s26, 0
      %p95 = por %p93, %p94
      %s97 = sadd.s32 %s96, 1
      %p100 = scmp.eq.s32.totalorder %s20, 1
      %p101 = scmp.ne.s32.totalorder %s96, %s98
      %p102 = scmp.eq.s32.totalorder %s20, 0
      %p103 = por %p101, %p102
      %p104 = scmp.ne.s32.totalorder %s96, %s98
      %p105 = scmp.eq.s32.totalorder %s25, 1
      %p106 = por %p104, %p105
      %p107 = scmp.ne.s32.totalorder %s98, %s99
      %p108 = scmp.eq.s32.totalorder %s25, 0
      %p109 = por %p107, %p108
      %p110 = scmp.ne.s32.totalorder %s98, %s99
      %p111 = scmp.eq.s32.totalorder %s26, 1
      %p112 = por %p110, %p111
      %p114 = scmp.ne.s32.totalorder %s99, %s113
      %p115 = scmp.eq.s32.totalorder %s26, 0
      %p116 = por %p114, %p115
      %s118 = sadd.s32 %s117, 1
      %p121 = scmp.eq.s32.totalorder %s20, 1
      %p122 = scmp.ne.s32.totalorder %s117, %s119
      %p123 = scmp.eq.s32.totalorder %s20, 0
      %p124 = por %p122, %p123
      %p125 = scmp.ne.s32.totalorder %s117, %s119
      %p126 = scmp.eq.s32.totalorder %s25, 1
      %p127 = por %p125, %p126
      %p128 = scmp.ne.s32.totalorder %s119, %s120
      %p129 = scmp.eq.s32.totalorder %s25, 0
      %p130 = por %p128, %p129
      %p131 = scmp.ne.s32.totalorder %s119, %s120
      %p132 = scmp.eq.s32.totalorder %s26, 1
      %p133 = por %p131, %p132
      %p135 = scmp.ne.s32.totalorder %s120, %s134
      %p136 = scmp.eq.s32.totalorder %s26, 0
      %p137 = por %p135, %p136
      %s138 = ssub.s32 %s20, %s27
      %p139 = scmp.eq.s32.totalorder %s138, 0
      %s141 = sadd.s32 %s140, 1
      %s142 = scalar_select %p139, %s140, %s141
      %p145 = pneg %p139
      %p146 = scmp.eq.s32.totalorder %s20, 1
      %p147 = por %p145, %p146
      %p148 = scmp.ne.s32.totalorder %s140, %s143
      %p149 = scmp.eq.s32.totalorder %s20, 0
      %p150 = por %p148, %p149
      %p151 = scmp.ne.s32.totalorder %s140, %s143
      %p152 = scmp.eq.s32.totalorder %s25, 1
      %p153 = por %p151, %p152
      %p154 = scmp.ne.s32.totalorder %s143, %s144
      %p155 = scmp.eq.s32.totalorder %s25, 0
      %p156 = por %p154, %p155
      %p157 = scmp.ne.s32.totalorder %s143, %s144
      %p158 = scmp.eq.s32.totalorder %s26, 1
      %p159 = por %p157, %p158
      %p161 = scmp.ne.s32.totalorder %s144, %s160
      %p162 = scmp.eq.s32.totalorder %s26, 0
      %p163 = por %p161, %p162
      %p164 = scmp.le.s32.totalorder 1, %s20
      %p165 = scmp.lt.s32.totalorder %s20, 3
      %p166 = pnand %p164, %p165
      %p167 = pneg %p166
      // Predicated region
      $region9: #{tpu_custom_call.1} parent=5 // pred_check
        _
      $region10: #{tpu_custom_call.1} parent=5 // pred_check_branch
        %169 = sbr.rel (%p166) target = $region12
      $region11: #{tpu_custom_call.1} parent=5 // pred_region
        %s170 = ssub.s32 %s20, 1
        // Predicated region
        $region13: #{tpu_custom_call.1} parent=11 // pred_check
          %p171 = pneg %p67
        $region14: #{tpu_custom_call.1} parent=11 // pred_check_branch
          %173 = sbr.rel (%p171) target = $region16
        $region15: #{tpu_custom_call.1} parent=11 // pred_region
          %175 = vsyncadd [#allocation6], 0
          %s177 = sshll.u32 %s1, 4
          %s178 = int_to_ptr.hbm [resolvable:$true] %s177
          %180 = dma.hbm_to_smem %s178, 16, [#allocation8], [#allocation6]
        $region16: #{tpu_custom_call.1} parent=11 // pred_fallthru
          _
        // Predicated region
        $region17: #{tpu_custom_call.1} parent=11 // pred_check
          %p181 = pneg %p88
        $region18: #{tpu_custom_call.1} parent=11 // pred_check_branch
          %183 = sbr.rel (%p181) target = $region20
        $region19: #{tpu_custom_call.1} parent=11 // pred_region
          %185 = vsyncadd [#allocation7], 0
          %s187 = sshll.u32 %s2, 4
          %s188 = int_to_ptr.vmem [resolvable:$true] %s187
          %190 = dma.vmem_to_smem %s188, 16, [#allocation9], [#allocation7]
        $region20: #{tpu_custom_call.1} parent=11 // pred_fallthru
          _
        // Predicated region
        $region21: #{tpu_custom_call.1} parent=11 // pred_check
          %p191 = pneg %p109
        $region22: #{tpu_custom_call.1} parent=11 // pred_check_branch
          %193 = sbr.rel (%p191) target = $region24
        $region23: #{tpu_custom_call.1} parent=11 // pred_region
          %195 = vsyncadd [#allocation11], 0
          %s197 = sshll.u32 %s3, 4
          %s198 = int_to_ptr.vmem [resolvable:$true] %s197
          %200 = dma.vmem_to_smem %s198, 16, [#allocation10], [#allocation11]
        $region24: #{tpu_custom_call.1} parent=11 // pred_fallthru
          _
        // Predicated region
        $region25: #{tpu_custom_call.1} parent=11 // pred_check
          %p201 = pneg %p130
        $region26: #{tpu_custom_call.1} parent=11 // pred_check_branch
          %203 = sbr.rel (%p201) target = $region28
        $region27: #{tpu_custom_call.1} parent=11 // pred_region
          %205 = vsyncadd [#allocation11], 0
          %s207 = sshll.u32 %s4, 4
          %s208 = int_to_ptr.vmem [resolvable:$true] %s207
          %210 = dma.vmem_to_smem %s208, 16, [#allocation12], [#allocation11]
        $region28: #{tpu_custom_call.1} parent=11 // pred_fallthru
          _
      $region12: #{tpu_custom_call.1} parent=5 // pred_fallthru
        _
      %p211 = scmp.lt.s32.totalorder %s20, 2
      // Predicated region
      $region29: #{tpu_custom_call.1} parent=5 // pred_check
        %p212 = pneg %p211
      $region30: #{tpu_custom_call.1} parent=5 // pred_check_branch
        %214 = sbr.rel (%p212) target = $region32
      $region31: #{tpu_custom_call.1} parent=5 // pred_region
        // Predicated region
        $region33: #{tpu_custom_call.1} parent=31 // pred_check
          %p215 = pneg %p40
        $region34: #{tpu_custom_call.1} parent=31 // pred_check_branch
          %217 = sbr.rel (%p215) target = $region36
        $region35: #{tpu_custom_call.1} parent=31 // pred_region
          %s218 = sand.u32 %s30, 1
          %s219 = scalar_lea.sflag [#allocation4], %s218
          %s220 = sand.u32 %s30, 1
          %s221 = smul.addr %s220, 96
          %s222 = scalar_lea.vmem [#allocation3], %s221
          %224 = vsyncadd %s219, 0
          %s225 = smul.addr %s20, 3
          %s226 = smul.addr %s225, 8
          %s227 = scalar_lea.hbm %s0, %s226
          %s228 = sshll.u32 %s227, 4
          %s229 = int_to_ptr.hbm [resolvable:$true] %s228
          %s230 = sshll.u32 %s222, 4
          %s231 = int_to_ptr.vmem [resolvable:$true] %s230
          %236 = dma.hbm_to_vmem [thread:$0]  %s229, 1536, %s231, %s219, 768, 384, 24
        $region36: #{tpu_custom_call.1} parent=31 // pred_fallthru
          _
      $region32: #{tpu_custom_call.1} parent=5 // pred_fallthru
        _
      %p237 = scmp.le.s32.totalorder 1, %s20
      %p238 = scmp.lt.s32.totalorder %s20, 3
      %p239 = pnand %p237, %p238
      %p240 = pneg %p239
      // Predicated region
      $region37: #{tpu_custom_call.1} parent=5 // pred_check
        _
      $region38: #{tpu_custom_call.1} parent=5 // pred_check_branch
        %242 = sbr.rel (%p239) target = $region40
      $region39: #{tpu_custom_call.1} parent=5 // pred_region
        %s243 = ssub.s32 %s20, 1
        %s244 = sand.u32 %s33, 1
        %s245 = scalar_lea.sflag [#allocation4], %s244
        %s246 = sand.u32 %s33, 1
        %s247 = smul.addr %s246, 96
        %s248 = scalar_lea.vmem [#allocation3], %s247
        // Predicated region
        $region41: #{tpu_custom_call.1} parent=39 // pred_check
          %p249 = pneg %p46
        $region42: #{tpu_custom_call.1} parent=39 // pred_check_branch
          %251 = sbr.rel (%p249) target = $region44
        $region43: #{tpu_custom_call.1} parent=39 // pred_region
          %253 = dma.done %s245, 1536
        $region44: #{tpu_custom_call.1} parent=39 // pred_fallthru
          _
        // Predicated region
        $region45: #{tpu_custom_call.1} parent=39 // pred_check
          %p254 = pneg %p67
        $region46: #{tpu_custom_call.1} parent=39 // pred_check_branch
          %256 = sbr.rel (%p254) target = $region48
        $region47: #{tpu_custom_call.1} parent=39 // pred_region
          %258 = dma.done [#allocation6], 16
        $region48: #{tpu_custom_call.1} parent=39 // pred_fallthru
          _
        // Predicated region
        $region49: #{tpu_custom_call.1} parent=39 // pred_check
          %p259 = pneg %p88
        $region50: #{tpu_custom_call.1} parent=39 // pred_check_branch
          %261 = sbr.rel (%p259) target = $region52
        $region51: #{tpu_custom_call.1} parent=39 // pred_region
          %263 = dma.done [#allocation7], 16
        $region52: #{tpu_custom_call.1} parent=39 // pred_fallthru
          _
        // Predicated region
        $region53: #{tpu_custom_call.1} parent=39 // pred_check
          %p264 = pneg %p109
        $region54: #{tpu_custom_call.1} parent=39 // pred_check_branch
          %266 = sbr.rel (%p264) target = $region56
        $region55: #{tpu_custom_call.1} parent=39 // pred_region
          %268 = dma.done [#allocation11], 16
        $region56: #{tpu_custom_call.1} parent=39 // pred_fallthru
          _
        // Predicated region
        $region57: #{tpu_custom_call.1} parent=39 // pred_check
          %p269 = pneg %p130
        $region58: #{tpu_custom_call.1} parent=39 // pred_check_branch
          %271 = sbr.rel (%p269) target = $region60
        $region59: #{tpu_custom_call.1} parent=39 // pred_region
          %273 = dma.done [#allocation11], 16
        $region60: #{tpu_custom_call.1} parent=39 // pred_fallthru
          _
        %274 = sfence
        %s275 = sand.u32 %s33, 1
        %s276 = scalar_lea.sflag [#allocation4], %s275
        %s277 = sand.u32 %s33, 1
        %s278 = smul.addr %s277, 96
        %s279 = scalar_lea.vmem [#allocation3], %s278
        %p280 = pneg %p46
        %p281 = pneg %p43
        %p282 = pneg %p67
        %p283 = pneg %p64
        %p284 = pneg %p88
        %p285 = pneg %p85
        %p286 = pneg %p109
        %p287 = pneg %p106
        %p288 = pneg %p130
        %p289 = pneg %p127
        %p290 = pneg %p156
        %p291 = pneg %p153
        %s292 = sand.u32 %s143, 1
        %s293 = scalar_lea.sflag [#allocation5], %s292
        %s294 = sand.u32 %s143, 1
        %s295 = smul.addr %s294, 96
        %s296 = scalar_lea.vmem [#allocation13], %s295
        %vm297 = vcmask 154624
        %298 = vst.msk [vmem:[#allocation2] sm:$0xff] %vm297, 0.0
        %299 = vst.msk [vmem:[#allocation2 + $0x18] sm:$0xff] %vm297, 0.0
        %vm300 = vcmask 572824
        %301 = vst.msk [vmem:[#allocation2 + $0x10] sm:$0xff] %vm300, 0.0
        %302 = vst.msk [vmem:[#allocation2 + $0x28] sm:$0xff] %vm300, 0.0
        %v303 = vlaneseq
        %v304 = vand.u32 %v303, 127
        %v305 = vadd.s32 %v304, 128
        %v306 = vadd.s32 %v304, 256
        %v307 = vadd.s32 %v304, 19
        %v308 = vadd.s32 %v305, 19
        %v309 = vadd.s32 %v306, 19
        %vm310 = vcmp.lt.s32.totalorder %v307, 0
        %v311 = vsub.s32 0, %v307
        %v312 = vsel %vm310, %v311, %v307
        %v313 = vand.u32 %v312, 65535
        %v314 = vshrl.u32 %v312, 16
        %v316 = vmul.u32 %v313, 14564
        %v317 = vmul.u32 %v313, 58254
        %v318 = vmul.u32 %v314, 14564
        %v319 = vmul.u32 %v314, 58254
        %v320 = vshll.u32 %v317, 16
        %v321 = vshrl.u32 %v317, 16
        %v322 = vshll.u32 %v318, 16
        %v323 = vshrl.u32 %v318, 16
        %vm324 = vc.u32 %v316, %v320
        %v325 = vsel %vm324, 1, 0
        %v326 = vadd.s32 %v316, %v320
        %v327 = vadd.s32 %v319, %v325
        %vm328 = vc.u32 %v326, %v322
        %v329 = vsel %vm328, 1, 0
        %v330 = vadd.s32 %v326, %v322
        %v331 = vadd.s32 %v327, %v329
        %v332 = vadd.s32 %v331, %v321
        %v333 = vadd.s32 %v332, %v323
        %v334 = vshrl.u32 %v333, 4
        %v335 = vmul.u32 %v334, 18
        %v336 = vsub.s32 %v312, %v335
        %v337 = vsub.s32 0, %v336
        %v338 = vsel %vm310, %v337, %v336
        %vm339 = vcmp.lt.s32.totalorder %v308, 0
        %v340 = vsub.s32 0, %v308
        %v341 = vsel %vm339, %v340, %v308
        %v342 = vand.u32 %v341, 65535
        %v343 = vshrl.u32 %v341, 16
        %v345 = vmul.u32 %v342, 14564
        %v346 = vmul.u32 %v342, 58254
        %v347 = vmul.u32 %v343, 14564
        %v348 = vmul.u32 %v343, 58254
        %v349 = vshll.u32 %v346, 16
        %v350 = vshrl.u32 %v346, 16
        %v351 = vshll.u32 %v347, 16
        %v352 = vshrl.u32 %v347, 16
        %vm353 = vc.u32 %v345, %v349
        %v354 = vsel %vm353, 1, 0
        %v355 = vadd.s32 %v345, %v349
        %v356 = vadd.s32 %v348, %v354
        %vm357 = vc.u32 %v355, %v351
        %v358 = vsel %vm357, 1, 0
        %v359 = vadd.s32 %v355, %v351
        %v360 = vadd.s32 %v356, %v358
        %v361 = vadd.s32 %v360, %v350
        %v362 = vadd.s32 %v361, %v352
        %v363 = vshrl.u32 %v362, 4
        %v364 = vmul.u32 %v363, 18
        %v365 = vsub.s32 %v341, %v364
        %v366 = vsub.s32 0, %v365
        %v367 = vsel %vm339, %v366, %v365
        %vm368 = vcmp.lt.s32.totalorder %v309, 0
        %v369 = vsub.s32 0, %v309
        %v370 = vsel %vm368, %v369, %v309
        %v371 = vand.u32 %v370, 65535
        %v372 = vshrl.u32 %v370, 16
        %v374 = vmul.u32 %v371, 14564
        %v375 = vmul.u32 %v371, 58254
        %v376 = vmul.u32 %v372, 14564
        %v377 = vmul.u32 %v372, 58254
        %v378 = vshll.u32 %v375, 16
        %v379 = vshrl.u32 %v375, 16
        %v380 = vshll.u32 %v376, 16
        %v381 = vshrl.u32 %v376, 16
        %vm382 = vc.u32 %v374, %v378
        %v383 = vsel %vm382, 1, 0
        %v384 = vadd.s32 %v374, %v378
        %v385 = vadd.s32 %v377, %v383
        %vm386 = vc.u32 %v384, %v380
        %v387 = vsel %vm386, 1, 0
        %v388 = vadd.s32 %v384, %v380
        %v389 = vadd.s32 %v385, %v387
        %v390 = vadd.s32 %v389, %v379
        %v391 = vadd.s32 %v390, %v381
        %v392 = vshrl.u32 %v391, 4
        %v393 = vmul.u32 %v392, 18
        %v394 = vsub.s32 %v370, %v393
        %v395 = vsub.s32 0, %v394
        %v396 = vsel %vm368, %v395, %v394
        %vm397 = vcmp.ne.s32.totalorder %v338, 0
        %vm398 = vcmp.ne.s32.totalorder %v367, 0
        %vm399 = vcmp.ne.s32.totalorder %v396, 0
        %vm400 = vcmp.lt.s32.totalorder %v338, 0
        %vm401 = vcmp.lt.s32.totalorder %v367, 0
        %vm402 = vcmp.lt.s32.totalorder %v396, 0
        %vm403 = vmand %vm400, %vm397
        %vm404 = vmand %vm401, %vm398
        %vm405 = vmand %vm402, %vm399
        %v406 = vadd.s32 %v338, 18
        %v407 = vadd.s32 %v367, 18
        %v408 = vadd.s32 %v396, 18
        %v409 = vsel %vm403, %v406, %v338
        %v410 = vsel %vm404, %v407, %v367
        %v411 = vsel %vm405, %v408, %v396
        %vm412 = vcmp.ge.s32.totalorder %v409, 1
        %vm413 = vcmp.ge.s32.totalorder %v410, 1
        %vm414 = vcmp.ge.s32.totalorder %v411, 1
        %vm415 = vcmp.le.s32.totalorder %v409, 16
        %vm416 = vcmp.le.s32.totalorder %v410, 16
        %vm417 = vcmp.le.s32.totalorder %v411, 16
        %vm418 = vmand %vm412, %vm415
        %vm419 = vmand %vm413, %vm416
        %vm420 = vmand %vm414, %vm417
        %s421 = sld [smem:[#allocation8]]
        %s422 = sld [smem:[#allocation8 + $0x1]]
        %s423 = sld [smem:[#allocation8 + $0x2]]
        %s424 = sld [smem:[#allocation8 + $0x3]]
        %s425 = sld [smem:[#allocation8 + $0x4]]
        %s426 = sld [smem:[#allocation8 + $0x5]]
        %s427 = sld [smem:[#allocation8 + $0x6]]
        %s428 = sld [smem:[#allocation8 + $0x7]]
        %s429 = sld [smem:[#allocation8 + $0x8]]
        %s430 = sld [smem:[#allocation8 + $0x9]]
        %s431 = sld [smem:[#allocation8 + $0xa]]
        %s432 = sld [smem:[#allocation8 + $0xb]]
        %s433 = sld [smem:[#allocation8 + $0xc]]
        %s434 = sld [smem:[#allocation8 + $0xd]]
        %s435 = sld [smem:[#allocation8 + $0xe]]
        %s436 = sld [smem:[#allocation8 + $0xf]]
        %s437 = sld [smem:[#allocation8 + $0x10]]
        %s438 = sld [smem:[#allocation8 + $0x11]]
        %s439 = sld [smem:[#allocation8 + $0x12]]
        %s440 = sld [smem:[#allocation8 + $0x13]]
        %s441 = sld [smem:[#allocation8 + $0x14]]
        %s442 = sld [smem:[#allocation8 + $0x15]]
        %s443 = sld [smem:[#allocation8 + $0x16]]
        %s444 = sld [smem:[#allocation8 + $0x17]]
        %s445 = sld [smem:[#allocation8 + $0x18]]
        %s446 = sld [smem:[#allocation8 + $0x19]]
        %s447 = sld [smem:[#allocation8 + $0x1a]]
        %s448 = sld [smem:[#allocation8 + $0x1b]]
        %s449 = sld [smem:[#allocation8 + $0x1c]]
        %s450 = sld [smem:[#allocation8 + $0x1d]]
        %s451 = sld [smem:[#allocation8 + $0x1e]]
        %s452 = sld [smem:[#allocation8 + $0x1f]]
        %s453 = sld [smem:[#allocation8 + $0x20]]
        %s454 = sld [smem:[#allocation8 + $0x21]]
        %s455 = sld [smem:[#allocation8 + $0x22]]
        %s456 = sld [smem:[#allocation8 + $0x23]]
        %s457 = sld [smem:[#allocation10]]
        %s458 = sld [smem:[#allocation10 + $0x1]]
        %s459 = sld [smem:[#allocation10 + $0x2]]
        %s460 = sld [smem:[#allocation10 + $0x3]]
        %s461 = sld [smem:[#allocation10 + $0x4]]
        %s462 = sld [smem:[#allocation10 + $0x5]]
        %s463 = sld [smem:[#allocation10 + $0x6]]
        %s464 = sld [smem:[#allocation10 + $0x7]]
        %s465 = sld [smem:[#allocation10 + $0x8]]
        %s466 = sld [smem:[#allocation10 + $0x9]]
        %s467 = sld [smem:[#allocation10 + $0xa]]
        %s468 = sld [smem:[#allocation10 + $0xb]]
        %s469 = sld [smem:[#allocation10 + $0xc]]
        %s470 = sld [smem:[#allocation10 + $0xd]]
        %s471 = sld [smem:[#allocation10 + $0xe]]
        %s472 = sld [smem:[#allocation10 + $0xf]]
        %s473 = sld [smem:[#allocation10 + $0x10]]
        %s474 = sld [smem:[#allocation10 + $0x11]]
        %s475 = sld [smem:[#allocation10 + $0x12]]
        %s476 = sld [smem:[#allocation10 + $0x13]]
        %s477 = sld [smem:[#allocation10 + $0x14]]
        %s478 = sld [smem:[#allocation10 + $0x15]]
        %s479 = sld [smem:[#allocation10 + $0x16]]
        %s480 = sld [smem:[#allocation10 + $0x17]]
        %s481 = sld [smem:[#allocation10 + $0x18]]
        %s482 = sld [smem:[#allocation10 + $0x19]]
        %s483 = sld [smem:[#allocation10 + $0x1a]]
        %s484 = sld [smem:[#allocation10 + $0x1b]]
        %s485 = sld [smem:[#allocation10 + $0x1c]]
        %s486 = sld [smem:[#allocation10 + $0x1d]]
        %s487 = sld [smem:[#allocation10 + $0x1e]]
        %s488 = sld [smem:[#allocation10 + $0x1f]]
        %s489 = sld [smem:[#allocation10 + $0x20]]
        %s490 = sld [smem:[#allocation10 + $0x21]]
        %s491 = sld [smem:[#allocation10 + $0x22]]
        %s492 = sld [smem:[#allocation10 + $0x23]]
        %s493 = sld [smem:[#allocation9]]
        %s494 = sld [smem:[#allocation9 + $0x1]]
        %s495 = sld [smem:[#allocation12]]
        %s496 = sld [smem:[#allocation12 + $0x1]]
        %v497 = vld [vmem:[%s248] sm:$0xff]
        %v498 = vld [vmem:[%s248 + $0x8] sm:$0xff]
        %v499 = vld [vmem:[%s248 + $0x10] sm:$0xff]
        %s500 = scalar_lea.vmem %s248, 24 [#allocation3]
        %v501 = vld [vmem:[%s500] sm:$0xff]
        %v502 = vld [vmem:[%s500 + $0x8] sm:$0xff]
        %v503 = vld [vmem:[%s500 + $0x10] sm:$0xff]
        %s504 = scalar_lea.vmem %s248, 48 [#allocation3]
        %v505 = vld [vmem:[%s504] sm:$0xff]
        %v506 = vld [vmem:[%s504 + $0x8] sm:$0xff]
        %v507 = vld [vmem:[%s504 + $0x10] sm:$0xff]
        %s508 = scalar_lea.vmem %s248, 72 [#allocation3]
        %v509 = vld [vmem:[%s508] sm:$0xff]
        %v510 = vld [vmem:[%s508 + $0x8] sm:$0xff]
        %v511 = vld [vmem:[%s508 + $0x10] sm:$0xff]
        %v512 = vstv %s493
        %v513 = vadd.f32 %v497, %v512
        %v514 = vadd.f32 %v498, %v512
        %v515 = vadd.f32 %v499, %v512
        %v516 = vstv %s494
        %v517 = vadd.f32 %v501, %v516
        %v518 = vadd.f32 %v502, %v516
        %v519 = vadd.f32 %v503, %v516
        %v520 = vstv %s421
        %v521 = vmul.f32 %v520, %v505
        %v522 = vmul.f32 %v520, %v506
        %v523 = vmul.f32 %v520, %v507
        %527 = vrot.lane.b32.xlu0 %v521, 19
        %v528 = vpop.permute.xlu0 %527
        %529 = vrot.lane.b32.xlu0 %v522, 19
        %v530 = vpop.permute.xlu0 %529
        %531 = vrot.lane.b32.xlu0 %v523, 19
        %v532 = vpop.permute.xlu0 %531
        %v533 = vsel %vm297, %v528, %v530
        %v534 = vsel %vm297, %v530, %v532
        %v538 = vadd.f32 %v513, %v528
        %v539 = vadd.f32 %v514, %v533
        %v540 = vadd.f32 %v515, %v534
        %v541 = vstv %s422
        %v542 = vmul.f32 %v541, %v505
        %v543 = vmul.f32 %v541, %v506
        %v544 = vmul.f32 %v541, %v507
        %548 = vrot.lane.b32.xlu0 %v542, 18
        %v549 = vpop.permute.xlu0 %548
        %550 = vrot.lane.b32.xlu0 %v543, 18
        %v551 = vpop.permute.xlu0 %550
        %552 = vrot.lane.b32.xlu0 %v544, 18
        %v553 = vpop.permute.xlu0 %552
        %vm554 = vcmask 146432
        %v555 = vsel %vm554, %v549, %v551
        %v556 = vsel %vm554, %v551, %v553
        %v560 = vadd.f32 %v538, %v549
        %v561 = vadd.f32 %v539, %v555
        %v562 = vadd.f32 %v540, %v556
        %v563 = vstv %s423
        %v564 = vmul.f32 %v563, %v505
        %v565 = vmul.f32 %v563, %v506
        %v566 = vmul.f32 %v563, %v507
        %570 = vrot.lane.b32.xlu0 %v564, 17
        %v571 = vpop.permute.xlu0 %570
        %572 = vrot.lane.b32.xlu0 %v565, 17
        %v573 = vpop.permute.xlu0 %572
        %574 = vrot.lane.b32.xlu0 %v566, 17
        %v575 = vpop.permute.xlu0 %574
        %vm576 = vcmask 138240
        %v577 = vsel %vm576, %v571, %v573
        %v578 = vsel %vm576, %v573, %v575
        %v582 = vadd.f32 %v560, %v571
        %v583 = vadd.f32 %v561, %v577
        %v584 = vadd.f32 %v562, %v578
        %v585 = vstv %s424
        %v586 = vmul.f32 %v585, %v505
        %v587 = vmul.f32 %v585, %v506
        %v588 = vmul.f32 %v585, %v507
        %592 = vrot.lane.b32.xlu0 %v586, 1
        %v593 = vpop.permute.xlu0 %592
        %594 = vrot.lane.b32.xlu0 %v587, 1
        %v595 = vpop.permute.xlu0 %594
        %596 = vrot.lane.b32.xlu0 %v588, 1
        %v597 = vpop.permute.xlu0 %596
        %vm598 = vcmask 7168
        %v599 = vsel %vm598, %v593, %v595
        %v600 = vsel %vm598, %v595, %v597
        %v604 = vadd.f32 %v582, %v593
        %v605 = vadd.f32 %v583, %v599
        %v606 = vadd.f32 %v584, %v600
        %v607 = vstv %s425
        %v608 = vmul.f32 %v607, %v505
        %v609 = vmul.f32 %v607, %v506
        %v610 = vmul.f32 %v607, %v507
        %v611 = vadd.f32 %v604, %v608
        %v612 = vadd.f32 %v605, %v609
        %v613 = vadd.f32 %v606, %v610
        %v614 = vstv %s426
        %v615 = vmul.f32 %v614, %v505
        %v616 = vmul.f32 %v614, %v506
        %v617 = vmul.f32 %v614, %v507
        %621 = vrot.lane.b32.xlu0 %v615, 127
        %v622 = vpop.permute.xlu0 %621
        %623 = vrot.lane.b32.xlu0 %v616, 127
        %v624 = vpop.permute.xlu0 %623
        %625 = vrot.lane.b32.xlu0 %v617, 127
        %v626 = vpop.permute.xlu0 %625
        %vm627 = vcmask 1039360
        %v628 = vsel %vm627, %v622, %v624
        %v629 = vsel %vm627, %v624, %v626
        %v633 = vadd.f32 %v611, %v628
        %v634 = vadd.f32 %v612, %v629
        %v635 = vadd.f32 %v613, %v626
        %v636 = vstv %s427
        %v637 = vmul.f32 %v636, %v505
        %v638 = vmul.f32 %v636, %v506
        %v639 = vmul.f32 %v636, %v507
        %643 = vrot.lane.b32.xlu0 %v637, 111
        %v644 = vpop.permute.xlu0 %643
        %645 = vrot.lane.b32.xlu0 %v638, 111
        %v646 = vpop.permute.xlu0 %645
        %647 = vrot.lane.b32.xlu0 %v639, 111
        %v648 = vpop.permute.xlu0 %647
        %vm649 = vcmask 908288
        %v650 = vsel %vm649, %v644, %v646
        %v651 = vsel %vm649, %v646, %v648
        %v655 = vadd.f32 %v633, %v650
        %v656 = vadd.f32 %v634, %v651
        %v657 = vadd.f32 %v635, %v648
        %v658 = vstv %s428
        %v659 = vmul.f32 %v658, %v505
        %v660 = vmul.f32 %v658, %v506
        %v661 = vmul.f32 %v658, %v507
        %665 = vrot.lane.b32.xlu0 %v659, 110
        %v666 = vpop.permute.xlu0 %665
        %667 = vrot.lane.b32.xlu0 %v660, 110
        %v668 = vpop.permute.xlu0 %667
        %669 = vrot.lane.b32.xlu0 %v661, 110
        %v670 = vpop.permute.xlu0 %669
        %vm671 = vcmask 900096
        %v672 = vsel %vm671, %v666, %v668
        %v673 = vsel %vm671, %v668, %v670
        %v677 = vadd.f32 %v655, %v672
        %v678 = vadd.f32 %v656, %v673
        %v679 = vadd.f32 %v657, %v670
        %v680 = vstv %s429
        %v681 = vmul.f32 %v680, %v505
        %v682 = vmul.f32 %v680, %v506
        %v683 = vmul.f32 %v680, %v507
        %687 = vrot.lane.b32.xlu0 %v681, 109
        %v688 = vpop.permute.xlu0 %687
        %689 = vrot.lane.b32.xlu0 %v682, 109
        %v690 = vpop.permute.xlu0 %689
        %691 = vrot.lane.b32.xlu0 %v683, 109
        %v692 = vpop.permute.xlu0 %691
        %vm693 = vcmask 891904
        %v694 = vsel %vm693, %v688, %v690
        %v695 = vsel %vm693, %v690, %v692
        %v699 = vadd.f32 %v677, %v694
        %v700 = vadd.f32 %v678, %v695
        %v701 = vadd.f32 %v679, %v692
        %v702 = vstv %s430
        %v703 = vmul.f32 %v702, %v509
        %v704 = vmul.f32 %v702, %v510
        %v705 = vmul.f32 %v702, %v511
        %709 = vrot.lane.b32.xlu0 %v703, 19
        %v710 = vpop.permute.xlu0 %709
        %711 = vrot.lane.b32.xlu0 %v704, 19
        %v712 = vpop.permute.xlu0 %711
        %713 = vrot.lane.b32.xlu0 %v705, 19
        %v714 = vpop.permute.xlu0 %713
        %v715 = vsel %vm297, %v710, %v712
        %v716 = vsel %vm297, %v712, %v714
        %v720 = vadd.f32 %v699, %v710
        %v721 = vadd.f32 %v700, %v715
        %v722 = vadd.f32 %v701, %v716
        %v723 = vstv %s431
        %v724 = vmul.f32 %v723, %v509
        %v725 = vmul.f32 %v723, %v510
        %v726 = vmul.f32 %v723, %v511
        %730 = vrot.lane.b32.xlu0 %v724, 18
        %v731 = vpop.permute.xlu0 %730
        %732 = vrot.lane.b32.xlu0 %v725, 18
        %v733 = vpop.permute.xlu0 %732
        %734 = vrot.lane.b32.xlu0 %v726, 18
        %v735 = vpop.permute.xlu0 %734
        %v736 = vsel %vm554, %v731, %v733
        %v737 = vsel %vm554, %v733, %v735
        %v741 = vadd.f32 %v720, %v731
        %v742 = vadd.f32 %v721, %v736
        %v743 = vadd.f32 %v722, %v737
        %v744 = vstv %s432
        %v745 = vmul.f32 %v744, %v509
        %v746 = vmul.f32 %v744, %v510
        %v747 = vmul.f32 %v744, %v511
        %751 = vrot.lane.b32.xlu0 %v745, 17
        %v752 = vpop.permute.xlu0 %751
        %753 = vrot.lane.b32.xlu0 %v746, 17
        %v754 = vpop.permute.xlu0 %753
        %755 = vrot.lane.b32.xlu0 %v747, 17
        %v756 = vpop.permute.xlu0 %755
        %v757 = vsel %vm576, %v752, %v754
        %v758 = vsel %vm576, %v754, %v756
        %v762 = vadd.f32 %v741, %v752
        %v763 = vadd.f32 %v742, %v757
        %v764 = vadd.f32 %v743, %v758
        %v765 = vstv %s433
        %v766 = vmul.f32 %v765, %v509
        %v767 = vmul.f32 %v765, %v510
        %v768 = vmul.f32 %v765, %v511
        %772 = vrot.lane.b32.xlu0 %v766, 1
        %v773 = vpop.permute.xlu0 %772
        %774 = vrot.lane.b32.xlu0 %v767, 1
        %v775 = vpop.permute.xlu0 %774
        %776 = vrot.lane.b32.xlu0 %v768, 1
        %v777 = vpop.permute.xlu0 %776
        %v778 = vsel %vm598, %v773, %v775
        %v779 = vsel %vm598, %v775, %v777
        %v783 = vadd.f32 %v762, %v773
        %v784 = vadd.f32 %v763, %v778
        %v785 = vadd.f32 %v764, %v779
        %v786 = vstv %s434
        %v787 = vmul.f32 %v786, %v509
        %v788 = vmul.f32 %v786, %v510
        %v789 = vmul.f32 %v786, %v511
        %v790 = vadd.f32 %v783, %v787
        %v791 = vadd.f32 %v784, %v788
        %v792 = vadd.f32 %v785, %v789
        %v793 = vstv %s435
        %v794 = vmul.f32 %v793, %v509
        %v795 = vmul.f32 %v793, %v510
        %v796 = vmul.f32 %v793, %v511
        %800 = vrot.lane.b32.xlu0 %v794, 127
        %v801 = vpop.permute.xlu0 %800
        %802 = vrot.lane.b32.xlu0 %v795, 127
        %v803 = vpop.permute.xlu0 %802
        %804 = vrot.lane.b32.xlu0 %v796, 127
        %v805 = vpop.permute.xlu0 %804
        %v806 = vsel %vm627, %v801, %v803
        %v807 = vsel %vm627, %v803, %v805
        %v811 = vadd.f32 %v790, %v806
        %v812 = vadd.f32 %v791, %v807
        %v813 = vadd.f32 %v792, %v805
        %v814 = vstv %s436
        %v815 = vmul.f32 %v814, %v509
        %v816 = vmul.f32 %v814, %v510
        %v817 = vmul.f32 %v814, %v511
        %821 = vrot.lane.b32.xlu0 %v815, 111
        %v822 = vpop.permute.xlu0 %821
        %823 = vrot.lane.b32.xlu0 %v816, 111
        %v824 = vpop.permute.xlu0 %823
        %825 = vrot.lane.b32.xlu0 %v817, 111
        %v826 = vpop.permute.xlu0 %825
        %v827 = vsel %vm649, %v822, %v824
        %v828 = vsel %vm649, %v824, %v826
        %v832 = vadd.f32 %v811, %v827
        %v833 = vadd.f32 %v812, %v828
        %v834 = vadd.f32 %v813, %v826
        %v835 = vstv %s437
        %v836 = vmul.f32 %v835, %v509
        %v837 = vmul.f32 %v835, %v510
        %v838 = vmul.f32 %v835, %v511
        %842 = vrot.lane.b32.xlu0 %v836, 110
        %v843 = vpop.permute.xlu0 %842
        %844 = vrot.lane.b32.xlu0 %v837, 110
        %v845 = vpop.permute.xlu0 %844
        %846 = vrot.lane.b32.xlu0 %v838, 110
        %v847 = vpop.permute.xlu0 %846
        %v848 = vsel %vm671, %v843, %v845
        %v849 = vsel %vm671, %v845, %v847
        %v853 = vadd.f32 %v832, %v848
        %v854 = vadd.f32 %v833, %v849
        %v855 = vadd.f32 %v834, %v847
        %v856 = vstv %s438
        %v857 = vmul.f32 %v856, %v509
        %v858 = vmul.f32 %v856, %v510
        %v859 = vmul.f32 %v856, %v511
        %863 = vrot.lane.b32.xlu0 %v857, 109
        %v864 = vpop.permute.xlu0 %863
        %865 = vrot.lane.b32.xlu0 %v858, 109
        %v866 = vpop.permute.xlu0 %865
        %867 = vrot.lane.b32.xlu0 %v859, 109
        %v868 = vpop.permute.xlu0 %867
        %v869 = vsel %vm693, %v864, %v866
        %v870 = vsel %vm693, %v866, %v868
        %v874 = vadd.f32 %v853, %v869
        %v875 = vadd.f32 %v854, %v870
        %v876 = vadd.f32 %v855, %v868
        %v877 = vstv %s439
        %v878 = vmul.f32 %v877, %v505
        %v879 = vmul.f32 %v877, %v506
        %v880 = vmul.f32 %v877, %v507
        %884 = vrot.lane.b32.xlu0 %v878, 19
        %v885 = vpop.permute.xlu0 %884
        %886 = vrot.lane.b32.xlu0 %v879, 19
        %v887 = vpop.permute.xlu0 %886
        %888 = vrot.lane.b32.xlu0 %v880, 19
        %v889 = vpop.permute.xlu0 %888
        %v890 = vsel %vm297, %v885, %v887
        %v891 = vsel %vm297, %v887, %v889
        %v895 = vadd.f32 %v517, %v885
        %v896 = vadd.f32 %v518, %v890
        %v897 = vadd.f32 %v519, %v891
        %v898 = vstv %s440
        %v899 = vmul.f32 %v898, %v505
        %v900 = vmul.f32 %v898, %v506
        %v901 = vmul.f32 %v898, %v507
        %905 = vrot.lane.b32.xlu0 %v899, 18
        %v906 = vpop.permute.xlu0 %905
        %907 = vrot.lane.b32.xlu0 %v900, 18
        %v908 = vpop.permute.xlu0 %907
        %909 = vrot.lane.b32.xlu0 %v901, 18
        %v910 = vpop.permute.xlu0 %909
        %v911 = vsel %vm554, %v906, %v908
        %v912 = vsel %vm554, %v908, %v910
        %v916 = vadd.f32 %v895, %v906
        %v917 = vadd.f32 %v896, %v911
        %v918 = vadd.f32 %v897, %v912
        %v919 = vstv %s441
        %v920 = vmul.f32 %v919, %v505
        %v921 = vmul.f32 %v919, %v506
        %v922 = vmul.f32 %v919, %v507
        %926 = vrot.lane.b32.xlu0 %v920, 17
        %v927 = vpop.permute.xlu0 %926
        %928 = vrot.lane.b32.xlu0 %v921, 17
        %v929 = vpop.permute.xlu0 %928
        %930 = vrot.lane.b32.xlu0 %v922, 17
        %v931 = vpop.permute.xlu0 %930
        %v932 = vsel %vm576, %v927, %v929
        %v933 = vsel %vm576, %v929, %v931
        %v937 = vadd.f32 %v916, %v927
        %v938 = vadd.f32 %v917, %v932
        %v939 = vadd.f32 %v918, %v933
        %v940 = vstv %s442
        %v941 = vmul.f32 %v940, %v505
        %v942 = vmul.f32 %v940, %v506
        %v943 = vmul.f32 %v940, %v507
        %947 = vrot.lane.b32.xlu0 %v941, 1
        %v948 = vpop.permute.xlu0 %947
        %949 = vrot.lane.b32.xlu0 %v942, 1
        %v950 = vpop.permute.xlu0 %949
        %951 = vrot.lane.b32.xlu0 %v943, 1
        %v952 = vpop.permute.xlu0 %951
        %v953 = vsel %vm598, %v948, %v950
        %v954 = vsel %vm598, %v950, %v952
        %v958 = vadd.f32 %v937, %v948
        %v959 = vadd.f32 %v938, %v953
        %v960 = vadd.f32 %v939, %v954
        %v961 = vstv %s443
        %v962 = vmul.f32 %v961, %v505
        %v963 = vmul.f32 %v961, %v506
        %v964 = vmul.f32 %v961, %v507
        %v965 = vadd.f32 %v958, %v962
        %v966 = vadd.f32 %v959, %v963
        %v967 = vadd.f32 %v960, %v964
        %v968 = vstv %s444
        %v969 = vmul.f32 %v968, %v505
        %v970 = vmul.f32 %v968, %v506
        %v971 = vmul.f32 %v968, %v507
        %975 = vrot.lane.b32.xlu0 %v969, 127
        %v976 = vpop.permute.xlu0 %975
        %977 = vrot.lane.b32.xlu0 %v970, 127
        %v978 = vpop.permute.xlu0 %977
        %979 = vrot.lane.b32.xlu0 %v971, 127
        %v980 = vpop.permute.xlu0 %979
        %v981 = vsel %vm627, %v976, %v978
        %v982 = vsel %vm627, %v978, %v980
        %v986 = vadd.f32 %v965, %v981
        %v987 = vadd.f32 %v966, %v982
        %v988 = vadd.f32 %v967, %v980
        %v989 = vstv %s445
        %v990 = vmul.f32 %v989, %v505
        %v991 = vmul.f32 %v989, %v506
        %v992 = vmul.f32 %v989, %v507
        %996 = vrot.lane.b32.xlu0 %v990, 111
        %v997 = vpop.permute.xlu0 %996
        %998 = vrot.lane.b32.xlu0 %v991, 111
        %v999 = vpop.permute.xlu0 %998
        %1000 = vrot.lane.b32.xlu0 %v992, 111
        %v1001 = vpop.permute.xlu0 %1000
        %v1002 = vsel %vm649, %v997, %v999
        %v1003 = vsel %vm649, %v999, %v1001
        %v1007 = vadd.f32 %v986, %v1002
        %v1008 = vadd.f32 %v987, %v1003
        %v1009 = vadd.f32 %v988, %v1001
        %v1010 = vstv %s446
        %v1011 = vmul.f32 %v1010, %v505
        %v1012 = vmul.f32 %v1010, %v506
        %v1013 = vmul.f32 %v1010, %v507
        %1017 = vrot.lane.b32.xlu0 %v1011, 110
        %v1018 = vpop.permute.xlu0 %1017
        %1019 = vrot.lane.b32.xlu0 %v1012, 110
        %v1020 = vpop.permute.xlu0 %1019
        %1021 = vrot.lane.b32.xlu0 %v1013, 110
        %v1022 = vpop.permute.xlu0 %1021
        %v1023 = vsel %vm671, %v1018, %v1020
        %v1024 = vsel %vm671, %v1020, %v1022
        %v1028 = vadd.f32 %v1007, %v1023
        %v1029 = vadd.f32 %v1008, %v1024
        %v1030 = vadd.f32 %v1009, %v1022
        %v1031 = vstv %s447
        %v1032 = vmul.f32 %v1031, %v505
        %v1033 = vmul.f32 %v1031, %v506
        %v1034 = vmul.f32 %v1031, %v507
        %1038 = vrot.lane.b32.xlu0 %v1032, 109
        %v1039 = vpop.permute.xlu0 %1038
        %1040 = vrot.lane.b32.xlu0 %v1033, 109
        %v1041 = vpop.permute.xlu0 %1040
        %1042 = vrot.lane.b32.xlu0 %v1034, 109
        %v1043 = vpop.permute.xlu0 %1042
        %v1044 = vsel %vm693, %v1039, %v1041
        %v1045 = vsel %vm693, %v1041, %v1043
        %v1049 = vadd.f32 %v1028, %v1044
        %v1050 = vadd.f32 %v1029, %v1045
        %v1051 = vadd.f32 %v1030, %v1043
        %v1052 = vstv %s448
        %v1053 = vmul.f32 %v1052, %v509
        %v1054 = vmul.f32 %v1052, %v510
        %v1055 = vmul.f32 %v1052, %v511
        %1059 = vrot.lane.b32.xlu0 %v1053, 19
        %v1060 = vpop.permute.xlu0 %1059
        %1061 = vrot.lane.b32.xlu0 %v1054, 19
        %v1062 = vpop.permute.xlu0 %1061
        %1063 = vrot.lane.b32.xlu0 %v1055, 19
        %v1064 = vpop.permute.xlu0 %1063
        %v1065 = vsel %vm297, %v1060, %v1062
        %v1066 = vsel %vm297, %v1062, %v1064
        %v1070 = vadd.f32 %v1049, %v1060
        %v1071 = vadd.f32 %v1050, %v1065
        %v1072 = vadd.f32 %v1051, %v1066
        %v1073 = vstv %s449
        %v1074 = vmul.f32 %v1073, %v509
        %v1075 = vmul.f32 %v1073, %v510
        %v1076 = vmul.f32 %v1073, %v511
        %1080 = vrot.lane.b32.xlu0 %v1074, 18
        %v1081 = vpop.permute.xlu0 %1080
        %1082 = vrot.lane.b32.xlu0 %v1075, 18
        %v1083 = vpop.permute.xlu0 %1082
        %1084 = vrot.lane.b32.xlu0 %v1076, 18
        %v1085 = vpop.permute.xlu0 %1084
        %v1086 = vsel %vm554, %v1081, %v1083
        %v1087 = vsel %vm554, %v1083, %v1085
        %v1091 = vadd.f32 %v1070, %v1081
        %v1092 = vadd.f32 %v1071, %v1086
        %v1093 = vadd.f32 %v1072, %v1087
        %v1094 = vstv %s450
        %v1095 = vmul.f32 %v1094, %v509
        %v1096 = vmul.f32 %v1094, %v510
        %v1097 = vmul.f32 %v1094, %v511
        %1101 = vrot.lane.b32.xlu0 %v1095, 17
        %v1102 = vpop.permute.xlu0 %1101
        %1103 = vrot.lane.b32.xlu0 %v1096, 17
        %v1104 = vpop.permute.xlu0 %1103
        %1105 = vrot.lane.b32.xlu0 %v1097, 17
        %v1106 = vpop.permute.xlu0 %1105
        %v1107 = vsel %vm576, %v1102, %v1104
        %v1108 = vsel %vm576, %v1104, %v1106
        %v1112 = vadd.f32 %v1091, %v1102
        %v1113 = vadd.f32 %v1092, %v1107
        %v1114 = vadd.f32 %v1093, %v1108
        %v1115 = vstv %s451
        %v1116 = vmul.f32 %v1115, %v509
        %v1117 = vmul.f32 %v1115, %v510
        %v1118 = vmul.f32 %v1115, %v511
        %1122 = vrot.lane.b32.xlu0 %v1116, 1
        %v1123 = vpop.permute.xlu0 %1122
        %1124 = vrot.lane.b32.xlu0 %v1117, 1
        %v1125 = vpop.permute.xlu0 %1124
        %1126 = vrot.lane.b32.xlu0 %v1118, 1
        %v1127 = vpop.permute.xlu0 %1126
        %v1128 = vsel %vm598, %v1123, %v1125
        %v1129 = vsel %vm598, %v1125, %v1127
        %v1133 = vadd.f32 %v1112, %v1123
        %v1134 = vadd.f32 %v1113, %v1128
        %v1135 = vadd.f32 %v1114, %v1129
        %v1136 = vstv %s452
        %v1137 = vmul.f32 %v1136, %v509
        %v1138 = vmul.f32 %v1136, %v510
        %v1139 = vmul.f32 %v1136, %v511
        %v1140 = vadd.f32 %v1133, %v1137
        %v1141 = vadd.f32 %v1134, %v1138
        %v1142 = vadd.f32 %v1135, %v1139
        %v1143 = vstv %s453
        %v1144 = vmul.f32 %v1143, %v509
        %v1145 = vmul.f32 %v1143, %v510
        %v1146 = vmul.f32 %v1143, %v511
        %1150 = vrot.lane.b32.xlu0 %v1144, 127
        %v1151 = vpop.permute.xlu0 %1150
        %1152 = vrot.lane.b32.xlu0 %v1145, 127
        %v1153 = vpop.permute.xlu0 %1152
        %1154 = vrot.lane.b32.xlu0 %v1146, 127
        %v1155 = vpop.permute.xlu0 %1154
        %v1156 = vsel %vm627, %v1151, %v1153
        %v1157 = vsel %vm627, %v1153, %v1155
        %v1161 = vadd.f32 %v1140, %v1156
        %v1162 = vadd.f32 %v1141, %v1157
        %v1163 = vadd.f32 %v1142, %v1155
        %v1164 = vstv %s454
        %v1165 = vmul.f32 %v1164, %v509
        %v1166 = vmul.f32 %v1164, %v510
        %v1167 = vmul.f32 %v1164, %v511
        %1171 = vrot.lane.b32.xlu0 %v1165, 111
        %v1172 = vpop.permute.xlu0 %1171
        %1173 = vrot.lane.b32.xlu0 %v1166, 111
        %v1174 = vpop.permute.xlu0 %1173
        %1175 = vrot.lane.b32.xlu0 %v1167, 111
        %v1176 = vpop.permute.xlu0 %1175
        %v1177 = vsel %vm649, %v1172, %v1174
        %v1178 = vsel %vm649, %v1174, %v1176
        %v1182 = vadd.f32 %v1161, %v1177
        %v1183 = vadd.f32 %v1162, %v1178
        %v1184 = vadd.f32 %v1163, %v1176
        %v1185 = vstv %s455
        %v1186 = vmul.f32 %v1185, %v509
        %v1187 = vmul.f32 %v1185, %v510
        %v1188 = vmul.f32 %v1185, %v511
        %1192 = vrot.lane.b32.xlu0 %v1186, 110
        %v1193 = vpop.permute.xlu0 %1192
        %1194 = vrot.lane.b32.xlu0 %v1187, 110
        %v1195 = vpop.permute.xlu0 %1194
        %1196 = vrot.lane.b32.xlu0 %v1188, 110
        %v1197 = vpop.permute.xlu0 %1196
        %v1198 = vsel %vm671, %v1193, %v1195
        %v1199 = vsel %vm671, %v1195, %v1197
        %v1203 = vadd.f32 %v1182, %v1198
        %v1204 = vadd.f32 %v1183, %v1199
        %v1205 = vadd.f32 %v1184, %v1197
        %v1206 = vstv %s456
        %v1207 = vmul.f32 %v1206, %v509
        %v1208 = vmul.f32 %v1206, %v510
        %v1209 = vmul.f32 %v1206, %v511
        %1213 = vrot.lane.b32.xlu0 %v1207, 109
        %v1214 = vpop.permute.xlu0 %1213
        %1215 = vrot.lane.b32.xlu0 %v1208, 109
        %v1216 = vpop.permute.xlu0 %1215
        %1217 = vrot.lane.b32.xlu0 %v1209, 109
        %v1218 = vpop.permute.xlu0 %1217
        %v1219 = vsel %vm693, %v1214, %v1216
        %v1220 = vsel %vm693, %v1216, %v1218
        %v1224 = vadd.f32 %v1203, %v1219
        %v1225 = vadd.f32 %v1204, %v1220
        %v1226 = vadd.f32 %v1205, %v1218
        %vm1227 = vcmask 1047704
        %1228 = vst.msk [vmem:[%s296] sm:$0xff] %vm1227, %v874
        %1229 = vst [vmem:[%s296 + $0x8] sm:$0xff] %v875
        %vm1230 = vcmask 416768
        %1231 = vst.msk [vmem:[%s296 + $0x10] sm:$0xff] %vm1230, %v876
        %v1232 = vsel %vm418, 1, 0
        %v1233 = vsel %vm419, 1, 0
        %v1234 = vsel %vm420, 1, 0
        %vm1235 = vcmp.eq.s32.totalorder %v1232, 1
        %vm1236 = vcmp.eq.s32.totalorder %v1233, 1
        %vm1237 = vcmp.eq.s32.totalorder %v1234, 1
        %1241 = vrot.lane.b32.xlu0 %v874, 109
        %v1242 = vpop.permute.xlu0 %1241
        %1243 = vrot.lane.b32.xlu0 %v875, 109
        %v1244 = vpop.permute.xlu0 %1243
        %1245 = vrot.lane.b32.xlu0 %v876, 109
        %v1246 = vpop.permute.xlu0 %1245
        %v1247 = vsel %vm693, %v1242, %v1244
        %v1248 = vsel %vm693, %v1244, %v1246
        %v1252 = vsel %vm1235, %v1247, 0.0
        %v1253 = vsel %vm1236, %v1248, 0.0
        %v1254 = vsel %vm1237, %v1246, 0.0
        %1258 = vrot.lane.b32.xlu0 %v1252, 19
        %v1259 = vpop.permute.xlu0 %1258
        %1260 = vrot.lane.b32.xlu0 %v1253, 19
        %v1261 = vpop.permute.xlu0 %1260
        %1262 = vrot.lane.b32.xlu0 %v1254, 19
        %v1263 = vpop.permute.xlu0 %1262
        %v1264 = vsel %vm297, %v1259, %v1261
        %v1265 = vsel %vm297, %v1261, %v1263
        %1269 = vst.msk [vmem:[#allocation2] sm:$0xff] %vm1227, %v1259
        %1270 = vst [vmem:[#allocation2 + $0x8] sm:$0xff] %v1264
        %1271 = vst.msk [vmem:[#allocation2 + $0x10] sm:$0xff] %vm1230, %v1265
        %s1272 = scalar_lea.vmem %s296, 24 [#allocation13]
        %1273 = vst.msk [vmem:[%s1272] sm:$0xff] %vm1227, %v1224
        %1274 = vst [vmem:[%s1272 + $0x8] sm:$0xff] %v1225
        %1275 = vst.msk [vmem:[%s1272 + $0x10] sm:$0xff] %vm1230, %v1226
        %1279 = vrot.lane.b32.xlu0 %v1224, 109
        %v1280 = vpop.permute.xlu0 %1279
        %1281 = vrot.lane.b32.xlu0 %v1225, 109
        %v1282 = vpop.permute.xlu0 %1281
        %1283 = vrot.lane.b32.xlu0 %v1226, 109
        %v1284 = vpop.permute.xlu0 %1283
        %v1285 = vsel %vm693, %v1280, %v1282
        %v1286 = vsel %vm693, %v1282, %v1284
        %v1290 = vsel %vm1235, %v1285, 0.0
        %v1291 = vsel %vm1236, %v1286, 0.0
        %v1292 = vsel %vm1237, %v1284, 0.0
        %1296 = vrot.lane.b32.xlu0 %v1290, 19
        %v1297 = vpop.permute.xlu0 %1296
        %1298 = vrot.lane.b32.xlu0 %v1291, 19
        %v1299 = vpop.permute.xlu0 %1298
        %1300 = vrot.lane.b32.xlu0 %v1292, 19
        %v1301 = vpop.permute.xlu0 %1300
        %v1302 = vsel %vm297, %v1297, %v1299
        %v1303 = vsel %vm297, %v1299, %v1301
        %s1307 = scalar_lea.vmem [#allocation2], 24
        %1308 = vst.msk [vmem:[%s1307] sm:$0xff] %vm1227, %v1297
        %1309 = vst [vmem:[%s1307 + $0x8] sm:$0xff] %v1302
        %1310 = vst.msk [vmem:[%s1307 + $0x10] sm:$0xff] %vm1230, %v1303
        %v1311 = vstv %s495
        %v1312 = vadd.f32 %v505, %v1311
        %v1313 = vadd.f32 %v506, %v1311
        %v1314 = vadd.f32 %v507, %v1311
        %v1315 = vstv %s496
        %v1316 = vadd.f32 %v509, %v1315
        %v1317 = vadd.f32 %v510, %v1315
        %v1318 = vadd.f32 %v511, %v1315
        %v1319 = vld [vmem:[#allocation2] sm:$0xff]
        %v1320 = vld [vmem:[#allocation2 + $0x8] sm:$0xff]
        %v1321 = vld [vmem:[#allocation2 + $0x10] sm:$0xff]
        %v1322 = vld [vmem:[%s1307] sm:$0xff]
        %v1323 = vld [vmem:[%s1307 + $0x8] sm:$0xff]
        %v1324 = vld [vmem:[%s1307 + $0x10] sm:$0xff]
        %v1325 = vstv %s457
        %v1326 = vmul.f32 %v1325, %v1319
        %v1327 = vmul.f32 %v1325, %v1320
        %v1328 = vmul.f32 %v1325, %v1321
        %1332 = vrot.lane.b32.xlu0 %v1326, 19
        %v1333 = vpop.permute.xlu0 %1332
        %1334 = vrot.lane.b32.xlu0 %v1327, 19
        %v1335 = vpop.permute.xlu0 %1334
        %1336 = vrot.lane.b32.xlu0 %v1328, 19
        %v1337 = vpop.permute.xlu0 %1336
        %v1338 = vsel %vm297, %v1333, %v1335
        %v1339 = vsel %vm297, %v1335, %v1337
        %v1343 = vadd.f32 %v1312, %v1333
        %v1344 = vadd.f32 %v1313, %v1338
        %v1345 = vadd.f32 %v1314, %v1339
        %v1346 = vstv %s458
        %v1347 = vmul.f32 %v1346, %v1319
        %v1348 = vmul.f32 %v1346, %v1320
        %v1349 = vmul.f32 %v1346, %v1321
        %1353 = vrot.lane.b32.xlu0 %v1347, 18
        %v1354 = vpop.permute.xlu0 %1353
        %1355 = vrot.lane.b32.xlu0 %v1348, 18
        %v1356 = vpop.permute.xlu0 %1355
        %1357 = vrot.lane.b32.xlu0 %v1349, 18
        %v1358 = vpop.permute.xlu0 %1357
        %v1359 = vsel %vm554, %v1354, %v1356
        %v1360 = vsel %vm554, %v1356, %v1358
        %v1364 = vadd.f32 %v1343, %v1354
        %v1365 = vadd.f32 %v1344, %v1359
        %v1366 = vadd.f32 %v1345, %v1360
        %v1367 = vstv %s459
        %v1368 = vmul.f32 %v1367, %v1319
        %v1369 = vmul.f32 %v1367, %v1320
        %v1370 = vmul.f32 %v1367, %v1321
        %1374 = vrot.lane.b32.xlu0 %v1368, 17
        %v1375 = vpop.permute.xlu0 %1374
        %1376 = vrot.lane.b32.xlu0 %v1369, 17
        %v1377 = vpop.permute.xlu0 %1376
        %1378 = vrot.lane.b32.xlu0 %v1370, 17
        %v1379 = vpop.permute.xlu0 %1378
        %v1380 = vsel %vm576, %v1375, %v1377
        %v1381 = vsel %vm576, %v1377, %v1379
        %v1385 = vadd.f32 %v1364, %v1375
        %v1386 = vadd.f32 %v1365, %v1380
        %v1387 = vadd.f32 %v1366, %v1381
        %v1388 = vstv %s460
        %v1389 = vmul.f32 %v1388, %v1319
        %v1390 = vmul.f32 %v1388, %v1320
        %v1391 = vmul.f32 %v1388, %v1321
        %1395 = vrot.lane.b32.xlu0 %v1389, 1
        %v1396 = vpop.permute.xlu0 %1395
        %1397 = vrot.lane.b32.xlu0 %v1390, 1
        %v1398 = vpop.permute.xlu0 %1397
        %1399 = vrot.lane.b32.xlu0 %v1391, 1
        %v1400 = vpop.permute.xlu0 %1399
        %v1401 = vsel %vm598, %v1396, %v1398
        %v1402 = vsel %vm598, %v1398, %v1400
        %v1406 = vadd.f32 %v1385, %v1396
        %v1407 = vadd.f32 %v1386, %v1401
        %v1408 = vadd.f32 %v1387, %v1402
        %v1409 = vstv %s461
        %v1410 = vmul.f32 %v1409, %v1319
        %v1411 = vmul.f32 %v1409, %v1320
        %v1412 = vmul.f32 %v1409, %v1321
        %v1413 = vadd.f32 %v1406, %v1410
        %v1414 = vadd.f32 %v1407, %v1411
        %v1415 = vadd.f32 %v1408, %v1412
        %v1416 = vstv %s462
        %v1417 = vmul.f32 %v1416, %v1319
        %v1418 = vmul.f32 %v1416, %v1320
        %v1419 = vmul.f32 %v1416, %v1321
        %1423 = vrot.lane.b32.xlu0 %v1417, 127
        %v1424 = vpop.permute.xlu0 %1423
        %1425 = vrot.lane.b32.xlu0 %v1418, 127
        %v1426 = vpop.permute.xlu0 %1425
        %1427 = vrot.lane.b32.xlu0 %v1419, 127
        %v1428 = vpop.permute.xlu0 %1427
        %v1429 = vsel %vm627, %v1424, %v1426
        %v1430 = vsel %vm627, %v1426, %v1428
        %v1434 = vadd.f32 %v1413, %v1429
        %v1435 = vadd.f32 %v1414, %v1430
        %v1436 = vadd.f32 %v1415, %v1428
        %v1437 = vstv %s463
        %v1438 = vmul.f32 %v1437, %v1319
        %v1439 = vmul.f32 %v1437, %v1320
        %v1440 = vmul.f32 %v1437, %v1321
        %1444 = vrot.lane.b32.xlu0 %v1438, 111
        %v1445 = vpop.permute.xlu0 %1444
        %1446 = vrot.lane.b32.xlu0 %v1439, 111
        %v1447 = vpop.permute.xlu0 %1446
        %1448 = vrot.lane.b32.xlu0 %v1440, 111
        %v1449 = vpop.permute.xlu0 %1448
        %v1450 = vsel %vm649, %v1445, %v1447
        %v1451 = vsel %vm649, %v1447, %v1449
        %v1455 = vadd.f32 %v1434, %v1450
        %v1456 = vadd.f32 %v1435, %v1451
        %v1457 = vadd.f32 %v1436, %v1449
        %v1458 = vstv %s464
        %v1459 = vmul.f32 %v1458, %v1319
        %v1460 = vmul.f32 %v1458, %v1320
        %v1461 = vmul.f32 %v1458, %v1321
        %1465 = vrot.lane.b32.xlu0 %v1459, 110
        %v1466 = vpop.permute.xlu0 %1465
        %1467 = vrot.lane.b32.xlu0 %v1460, 110
        %v1468 = vpop.permute.xlu0 %1467
        %1469 = vrot.lane.b32.xlu0 %v1461, 110
        %v1470 = vpop.permute.xlu0 %1469
        %v1471 = vsel %vm671, %v1466, %v1468
        %v1472 = vsel %vm671, %v1468, %v1470
        %v1476 = vadd.f32 %v1455, %v1471
        %v1477 = vadd.f32 %v1456, %v1472
        %v1478 = vadd.f32 %v1457, %v1470
        %v1479 = vstv %s465
        %v1480 = vmul.f32 %v1479, %v1319
        %v1481 = vmul.f32 %v1479, %v1320
        %v1482 = vmul.f32 %v1479, %v1321
        %1486 = vrot.lane.b32.xlu0 %v1480, 109
        %v1487 = vpop.permute.xlu0 %1486
        %1488 = vrot.lane.b32.xlu0 %v1481, 109
        %v1489 = vpop.permute.xlu0 %1488
        %1490 = vrot.lane.b32.xlu0 %v1482, 109
        %v1491 = vpop.permute.xlu0 %1490
        %v1492 = vsel %vm693, %v1487, %v1489
        %v1493 = vsel %vm693, %v1489, %v1491
        %v1497 = vadd.f32 %v1476, %v1492
        %v1498 = vadd.f32 %v1477, %v1493
        %v1499 = vadd.f32 %v1478, %v1491
        %v1500 = vstv %s466
        %v1501 = vmul.f32 %v1500, %v1322
        %v1502 = vmul.f32 %v1500, %v1323
        %v1503 = vmul.f32 %v1500, %v1324
        %1507 = vrot.lane.b32.xlu0 %v1501, 19
        %v1508 = vpop.permute.xlu0 %1507
        %1509 = vrot.lane.b32.xlu0 %v1502, 19
        %v1510 = vpop.permute.xlu0 %1509
        %1511 = vrot.lane.b32.xlu0 %v1503, 19
        %v1512 = vpop.permute.xlu0 %1511
        %v1513 = vsel %vm297, %v1508, %v1510
        %v1514 = vsel %vm297, %v1510, %v1512
        %v1518 = vadd.f32 %v1497, %v1508
        %v1519 = vadd.f32 %v1498, %v1513
        %v1520 = vadd.f32 %v1499, %v1514
        %v1521 = vstv %s467
        %v1522 = vmul.f32 %v1521, %v1322
        %v1523 = vmul.f32 %v1521, %v1323
        %v1524 = vmul.f32 %v1521, %v1324
        %1528 = vrot.lane.b32.xlu0 %v1522, 18
        %v1529 = vpop.permute.xlu0 %1528
        %1530 = vrot.lane.b32.xlu0 %v1523, 18
        %v1531 = vpop.permute.xlu0 %1530
        %1532 = vrot.lane.b32.xlu0 %v1524, 18
        %v1533 = vpop.permute.xlu0 %1532
        %v1534 = vsel %vm554, %v1529, %v1531
        %v1535 = vsel %vm554, %v1531, %v1533
        %v1539 = vadd.f32 %v1518, %v1529
        %v1540 = vadd.f32 %v1519, %v1534
        %v1541 = vadd.f32 %v1520, %v1535
        %v1542 = vstv %s468
        %v1543 = vmul.f32 %v1542, %v1322
        %v1544 = vmul.f32 %v1542, %v1323
        %v1545 = vmul.f32 %v1542, %v1324
        %1549 = vrot.lane.b32.xlu0 %v1543, 17
        %v1550 = vpop.permute.xlu0 %1549
        %1551 = vrot.lane.b32.xlu0 %v1544, 17
        %v1552 = vpop.permute.xlu0 %1551
        %1553 = vrot.lane.b32.xlu0 %v1545, 17
        %v1554 = vpop.permute.xlu0 %1553
        %v1555 = vsel %vm576, %v1550, %v1552
        %v1556 = vsel %vm576, %v1552, %v1554
        %v1560 = vadd.f32 %v1539, %v1550
        %v1561 = vadd.f32 %v1540, %v1555
        %v1562 = vadd.f32 %v1541, %v1556
        %v1563 = vstv %s469
        %v1564 = vmul.f32 %v1563, %v1322
        %v1565 = vmul.f32 %v1563, %v1323
        %v1566 = vmul.f32 %v1563, %v1324
        %1570 = vrot.lane.b32.xlu0 %v1564, 1
        %v1571 = vpop.permute.xlu0 %1570
        %1572 = vrot.lane.b32.xlu0 %v1565, 1
        %v1573 = vpop.permute.xlu0 %1572
        %1574 = vrot.lane.b32.xlu0 %v1566, 1
        %v1575 = vpop.permute.xlu0 %1574
        %v1576 = vsel %vm598, %v1571, %v1573
        %v1577 = vsel %vm598, %v1573, %v1575
        %v1581 = vadd.f32 %v1560, %v1571
        %v1582 = vadd.f32 %v1561, %v1576
        %v1583 = vadd.f32 %v1562, %v1577
        %v1584 = vstv %s470
        %v1585 = vmul.f32 %v1584, %v1322
        %v1586 = vmul.f32 %v1584, %v1323
        %v1587 = vmul.f32 %v1584, %v1324
        %v1588 = vadd.f32 %v1581, %v1585
        %v1589 = vadd.f32 %v1582, %v1586
        %v1590 = vadd.f32 %v1583, %v1587
        %v1591 = vstv %s471
        %v1592 = vmul.f32 %v1591, %v1322
        %v1593 = vmul.f32 %v1591, %v1323
        %v1594 = vmul.f32 %v1591, %v1324
        %1598 = vrot.lane.b32.xlu0 %v1592, 127
        %v1599 = vpop.permute.xlu0 %1598
        %1600 = vrot.lane.b32.xlu0 %v1593, 127
        %v1601 = vpop.permute.xlu0 %1600
        %1602 = vrot.lane.b32.xlu0 %v1594, 127
        %v1603 = vpop.permute.xlu0 %1602
        %v1604 = vsel %vm627, %v1599, %v1601
        %v1605 = vsel %vm627, %v1601, %v1603
        %v1609 = vadd.f32 %v1588, %v1604
        %v1610 = vadd.f32 %v1589, %v1605
        %v1611 = vadd.f32 %v1590, %v1603
        %v1612 = vstv %s472
        %v1613 = vmul.f32 %v1612, %v1322
        %v1614 = vmul.f32 %v1612, %v1323
        %v1615 = vmul.f32 %v1612, %v1324
        %1619 = vrot.lane.b32.xlu0 %v1613, 111
        %v1620 = vpop.permute.xlu0 %1619
        %1621 = vrot.lane.b32.xlu0 %v1614, 111
        %v1622 = vpop.permute.xlu0 %1621
        %1623 = vrot.lane.b32.xlu0 %v1615, 111
        %v1624 = vpop.permute.xlu0 %1623
        %v1625 = vsel %vm649, %v1620, %v1622
        %v1626 = vsel %vm649, %v1622, %v1624
        %v1630 = vadd.f32 %v1609, %v1625
        %v1631 = vadd.f32 %v1610, %v1626
        %v1632 = vadd.f32 %v1611, %v1624
        %v1633 = vstv %s473
        %v1634 = vmul.f32 %v1633, %v1322
        %v1635 = vmul.f32 %v1633, %v1323
        %v1636 = vmul.f32 %v1633, %v1324
        %1640 = vrot.lane.b32.xlu0 %v1634, 110
        %v1641 = vpop.permute.xlu0 %1640
        %1642 = vrot.lane.b32.xlu0 %v1635, 110
        %v1643 = vpop.permute.xlu0 %1642
        %1644 = vrot.lane.b32.xlu0 %v1636, 110
        %v1645 = vpop.permute.xlu0 %1644
        %v1646 = vsel %vm671, %v1641, %v1643
        %v1647 = vsel %vm671, %v1643, %v1645
        %v1651 = vadd.f32 %v1630, %v1646
        %v1652 = vadd.f32 %v1631, %v1647
        %v1653 = vadd.f32 %v1632, %v1645
        %v1654 = vstv %s474
        %v1655 = vmul.f32 %v1654, %v1322
        %v1656 = vmul.f32 %v1654, %v1323
        %v1657 = vmul.f32 %v1654, %v1324
        %1661 = vrot.lane.b32.xlu0 %v1655, 109
        %v1662 = vpop.permute.xlu0 %1661
        %1663 = vrot.lane.b32.xlu0 %v1656, 109
        %v1664 = vpop.permute.xlu0 %1663
        %1665 = vrot.lane.b32.xlu0 %v1657, 109
        %v1666 = vpop.permute.xlu0 %1665
        %v1667 = vsel %vm693, %v1662, %v1664
        %v1668 = vsel %vm693, %v1664, %v1666
        %v1672 = vadd.f32 %v1651, %v1667
        %v1673 = vadd.f32 %v1652, %v1668
        %v1674 = vadd.f32 %v1653, %v1666
        %v1675 = vstv %s475
        %v1676 = vmul.f32 %v1675, %v1319
        %v1677 = vmul.f32 %v1675, %v1320
        %v1678 = vmul.f32 %v1675, %v1321
        %1682 = vrot.lane.b32.xlu0 %v1676, 19
        %v1683 = vpop.permute.xlu0 %1682
        %1684 = vrot.lane.b32.xlu0 %v1677, 19
        %v1685 = vpop.permute.xlu0 %1684
        %1686 = vrot.lane.b32.xlu0 %v1678, 19
        %v1687 = vpop.permute.xlu0 %1686
        %v1688 = vsel %vm297, %v1683, %v1685
        %v1689 = vsel %vm297, %v1685, %v1687
        %v1693 = vadd.f32 %v1316, %v1683
        %v1694 = vadd.f32 %v1317, %v1688
        %v1695 = vadd.f32 %v1318, %v1689
        %v1696 = vstv %s476
        %v1697 = vmul.f32 %v1696, %v1319
        %v1698 = vmul.f32 %v1696, %v1320
        %v1699 = vmul.f32 %v1696, %v1321
        %1703 = vrot.lane.b32.xlu0 %v1697, 18
        %v1704 = vpop.permute.xlu0 %1703
        %1705 = vrot.lane.b32.xlu0 %v1698, 18
        %v1706 = vpop.permute.xlu0 %1705
        %1707 = vrot.lane.b32.xlu0 %v1699, 18
        %v1708 = vpop.permute.xlu0 %1707
        %v1709 = vsel %vm554, %v1704, %v1706
        %v1710 = vsel %vm554, %v1706, %v1708
        %v1714 = vadd.f32 %v1693, %v1704
        %v1715 = vadd.f32 %v1694, %v1709
        %v1716 = vadd.f32 %v1695, %v1710
        %v1717 = vstv %s477
        %v1718 = vmul.f32 %v1717, %v1319
        %v1719 = vmul.f32 %v1717, %v1320
        %v1720 = vmul.f32 %v1717, %v1321
        %1724 = vrot.lane.b32.xlu0 %v1718, 17
        %v1725 = vpop.permute.xlu0 %1724
        %1726 = vrot.lane.b32.xlu0 %v1719, 17
        %v1727 = vpop.permute.xlu0 %1726
        %1728 = vrot.lane.b32.xlu0 %v1720, 17
        %v1729 = vpop.permute.xlu0 %1728
        %v1730 = vsel %vm576, %v1725, %v1727
        %v1731 = vsel %vm576, %v1727, %v1729
        %v1735 = vadd.f32 %v1714, %v1725
        %v1736 = vadd.f32 %v1715, %v1730
        %v1737 = vadd.f32 %v1716, %v1731
        %v1738 = vstv %s478
        %v1739 = vmul.f32 %v1738, %v1319
        %v1740 = vmul.f32 %v1738, %v1320
        %v1741 = vmul.f32 %v1738, %v1321
        %1745 = vrot.lane.b32.xlu0 %v1739, 1
        %v1746 = vpop.permute.xlu0 %1745
        %1747 = vrot.lane.b32.xlu0 %v1740, 1
        %v1748 = vpop.permute.xlu0 %1747
        %1749 = vrot.lane.b32.xlu0 %v1741, 1
        %v1750 = vpop.permute.xlu0 %1749
        %v1751 = vsel %vm598, %v1746, %v1748
        %v1752 = vsel %vm598, %v1748, %v1750
        %v1756 = vadd.f32 %v1735, %v1746
        %v1757 = vadd.f32 %v1736, %v1751
        %v1758 = vadd.f32 %v1737, %v1752
        %v1759 = vstv %s479
        %v1760 = vmul.f32 %v1759, %v1319
        %v1761 = vmul.f32 %v1759, %v1320
        %v1762 = vmul.f32 %v1759, %v1321
        %v1763 = vadd.f32 %v1756, %v1760
        %v1764 = vadd.f32 %v1757, %v1761
        %v1765 = vadd.f32 %v1758, %v1762
        %v1766 = vstv %s480
        %v1767 = vmul.f32 %v1766, %v1319
        %v1768 = vmul.f32 %v1766, %v1320
        %v1769 = vmul.f32 %v1766, %v1321
        %1773 = vrot.lane.b32.xlu0 %v1767, 127
        %v1774 = vpop.permute.xlu0 %1773
        %1775 = vrot.lane.b32.xlu0 %v1768, 127
        %v1776 = vpop.permute.xlu0 %1775
        %1777 = vrot.lane.b32.xlu0 %v1769, 127
        %v1778 = vpop.permute.xlu0 %1777
        %v1779 = vsel %vm627, %v1774, %v1776
        %v1780 = vsel %vm627, %v1776, %v1778
        %v1784 = vadd.f32 %v1763, %v1779
        %v1785 = vadd.f32 %v1764, %v1780
        %v1786 = vadd.f32 %v1765, %v1778
        %v1787 = vstv %s481
        %v1788 = vmul.f32 %v1787, %v1319
        %v1789 = vmul.f32 %v1787, %v1320
        %v1790 = vmul.f32 %v1787, %v1321
        %1794 = vrot.lane.b32.xlu0 %v1788, 111
        %v1795 = vpop.permute.xlu0 %1794
        %1796 = vrot.lane.b32.xlu0 %v1789, 111
        %v1797 = vpop.permute.xlu0 %1796
        %1798 = vrot.lane.b32.xlu0 %v1790, 111
        %v1799 = vpop.permute.xlu0 %1798
        %v1800 = vsel %vm649, %v1795, %v1797
        %v1801 = vsel %vm649, %v1797, %v1799
        %v1805 = vadd.f32 %v1784, %v1800
        %v1806 = vadd.f32 %v1785, %v1801
        %v1807 = vadd.f32 %v1786, %v1799
        %v1808 = vstv %s482
        %v1809 = vmul.f32 %v1808, %v1319
        %v1810 = vmul.f32 %v1808, %v1320
        %v1811 = vmul.f32 %v1808, %v1321
        %1815 = vrot.lane.b32.xlu0 %v1809, 110
        %v1816 = vpop.permute.xlu0 %1815
        %1817 = vrot.lane.b32.xlu0 %v1810, 110
        %v1818 = vpop.permute.xlu0 %1817
        %1819 = vrot.lane.b32.xlu0 %v1811, 110
        %v1820 = vpop.permute.xlu0 %1819
        %v1821 = vsel %vm671, %v1816, %v1818
        %v1822 = vsel %vm671, %v1818, %v1820
        %v1826 = vadd.f32 %v1805, %v1821
        %v1827 = vadd.f32 %v1806, %v1822
        %v1828 = vadd.f32 %v1807, %v1820
        %v1829 = vstv %s483
        %v1830 = vmul.f32 %v1829, %v1319
        %v1831 = vmul.f32 %v1829, %v1320
        %v1832 = vmul.f32 %v1829, %v1321
        %1836 = vrot.lane.b32.xlu0 %v1830, 109
        %v1837 = vpop.permute.xlu0 %1836
        %1838 = vrot.lane.b32.xlu0 %v1831, 109
        %v1839 = vpop.permute.xlu0 %1838
        %1840 = vrot.lane.b32.xlu0 %v1832, 109
        %v1841 = vpop.permute.xlu0 %1840
        %v1842 = vsel %vm693, %v1837, %v1839
        %v1843 = vsel %vm693, %v1839, %v1841
        %v1847 = vadd.f32 %v1826, %v1842
        %v1848 = vadd.f32 %v1827, %v1843
        %v1849 = vadd.f32 %v1828, %v1841
        %v1850 = vstv %s484
        %v1851 = vmul.f32 %v1850, %v1322
        %v1852 = vmul.f32 %v1850, %v1323
        %v1853 = vmul.f32 %v1850, %v1324
        %1857 = vrot.lane.b32.xlu0 %v1851, 19
        %v1858 = vpop.permute.xlu0 %1857
        %1859 = vrot.lane.b32.xlu0 %v1852, 19
        %v1860 = vpop.permute.xlu0 %1859
        %1861 = vrot.lane.b32.xlu0 %v1853, 19
        %v1862 = vpop.permute.xlu0 %1861
        %v1863 = vsel %vm297, %v1858, %v1860
        %v1864 = vsel %vm297, %v1860, %v1862
        %v1868 = vadd.f32 %v1847, %v1858
        %v1869 = vadd.f32 %v1848, %v1863
        %v1870 = vadd.f32 %v1849, %v1864
        %v1871 = vstv %s485
        %v1872 = vmul.f32 %v1871, %v1322
        %v1873 = vmul.f32 %v1871, %v1323
        %v1874 = vmul.f32 %v1871, %v1324
        %1878 = vrot.lane.b32.xlu0 %v1872, 18
        %v1879 = vpop.permute.xlu0 %1878
        %1880 = vrot.lane.b32.xlu0 %v1873, 18
        %v1881 = vpop.permute.xlu0 %1880
        %1882 = vrot.lane.b32.xlu0 %v1874, 18
        %v1883 = vpop.permute.xlu0 %1882
        %v1884 = vsel %vm554, %v1879, %v1881
        %v1885 = vsel %vm554, %v1881, %v1883
        %v1889 = vadd.f32 %v1868, %v1879
        %v1890 = vadd.f32 %v1869, %v1884
        %v1891 = vadd.f32 %v1870, %v1885
        %v1892 = vstv %s486
        %v1893 = vmul.f32 %v1892, %v1322
        %v1894 = vmul.f32 %v1892, %v1323
        %v1895 = vmul.f32 %v1892, %v1324
        %1899 = vrot.lane.b32.xlu0 %v1893, 17
        %v1900 = vpop.permute.xlu0 %1899
        %1901 = vrot.lane.b32.xlu0 %v1894, 17
        %v1902 = vpop.permute.xlu0 %1901
        %1903 = vrot.lane.b32.xlu0 %v1895, 17
        %v1904 = vpop.permute.xlu0 %1903
        %v1905 = vsel %vm576, %v1900, %v1902
        %v1906 = vsel %vm576, %v1902, %v1904
        %v1910 = vadd.f32 %v1889, %v1900
        %v1911 = vadd.f32 %v1890, %v1905
        %v1912 = vadd.f32 %v1891, %v1906
        %v1913 = vstv %s487
        %v1914 = vmul.f32 %v1913, %v1322
        %v1915 = vmul.f32 %v1913, %v1323
        %v1916 = vmul.f32 %v1913, %v1324
        %1920 = vrot.lane.b32.xlu0 %v1914, 1
        %v1921 = vpop.permute.xlu0 %1920
        %1922 = vrot.lane.b32.xlu0 %v1915, 1
        %v1923 = vpop.permute.xlu0 %1922
        %1924 = vrot.lane.b32.xlu0 %v1916, 1
        %v1925 = vpop.permute.xlu0 %1924
        %v1926 = vsel %vm598, %v1921, %v1923
        %v1927 = vsel %vm598, %v1923, %v1925
        %v1931 = vadd.f32 %v1910, %v1921
        %v1932 = vadd.f32 %v1911, %v1926
        %v1933 = vadd.f32 %v1912, %v1927
        %v1934 = vstv %s488
        %v1935 = vmul.f32 %v1934, %v1322
        %v1936 = vmul.f32 %v1934, %v1323
        %v1937 = vmul.f32 %v1934, %v1324
        %v1938 = vadd.f32 %v1931, %v1935
        %v1939 = vadd.f32 %v1932, %v1936
        %v1940 = vadd.f32 %v1933, %v1937
        %v1941 = vstv %s489
        %v1942 = vmul.f32 %v1941, %v1322
        %v1943 = vmul.f32 %v1941, %v1323
        %v1944 = vmul.f32 %v1941, %v1324
        %1948 = vrot.lane.b32.xlu0 %v1942, 127
        %v1949 = vpop.permute.xlu0 %1948
        %1950 = vrot.lane.b32.xlu0 %v1943, 127
        %v1951 = vpop.permute.xlu0 %1950
        %1952 = vrot.lane.b32.xlu0 %v1944, 127
        %v1953 = vpop.permute.xlu0 %1952
        %v1954 = vsel %vm627, %v1949, %v1951
        %v1955 = vsel %vm627, %v1951, %v1953
        %v1959 = vadd.f32 %v1938, %v1954
        %v1960 = vadd.f32 %v1939, %v1955
        %v1961 = vadd.f32 %v1940, %v1953
        %v1962 = vstv %s490
        %v1963 = vmul.f32 %v1962, %v1322
        %v1964 = vmul.f32 %v1962, %v1323
        %v1965 = vmul.f32 %v1962, %v1324
        %1969 = vrot.lane.b32.xlu0 %v1963, 111
        %v1970 = vpop.permute.xlu0 %1969
        %1971 = vrot.lane.b32.xlu0 %v1964, 111
        %v1972 = vpop.permute.xlu0 %1971
        %1973 = vrot.lane.b32.xlu0 %v1965, 111
        %v1974 = vpop.permute.xlu0 %1973
        %v1975 = vsel %vm649, %v1970, %v1972
        %v1976 = vsel %vm649, %v1972, %v1974
        %v1980 = vadd.f32 %v1959, %v1975
        %v1981 = vadd.f32 %v1960, %v1976
        %v1982 = vadd.f32 %v1961, %v1974
        %v1983 = vstv %s491
        %v1984 = vmul.f32 %v1983, %v1322
        %v1985 = vmul.f32 %v1983, %v1323
        %v1986 = vmul.f32 %v1983, %v1324
        %1990 = vrot.lane.b32.xlu0 %v1984, 110
        %v1991 = vpop.permute.xlu0 %1990
        %1992 = vrot.lane.b32.xlu0 %v1985, 110
        %v1993 = vpop.permute.xlu0 %1992
        %1994 = vrot.lane.b32.xlu0 %v1986, 110
        %v1995 = vpop.permute.xlu0 %1994
        %v1996 = vsel %vm671, %v1991, %v1993
        %v1997 = vsel %vm671, %v1993, %v1995
        %v2001 = vadd.f32 %v1980, %v1996
        %v2002 = vadd.f32 %v1981, %v1997
        %v2003 = vadd.f32 %v1982, %v1995
        %v2004 = vstv %s492
        %v2005 = vmul.f32 %v2004, %v1322
        %v2006 = vmul.f32 %v2004, %v1323
        %v2007 = vmul.f32 %v2004, %v1324
        %2011 = vrot.lane.b32.xlu0 %v2005, 109
        %v2012 = vpop.permute.xlu0 %2011
        %2013 = vrot.lane.b32.xlu0 %v2006, 109
        %v2014 = vpop.permute.xlu0 %2013
        %2015 = vrot.lane.b32.xlu0 %v2007, 109
        %v2016 = vpop.permute.xlu0 %2015
        %v2017 = vsel %vm693, %v2012, %v2014
        %v2018 = vsel %vm693, %v2014, %v2016
        %v2022 = vadd.f32 %v2001, %v2017
        %v2023 = vadd.f32 %v2002, %v2018
        %v2024 = vadd.f32 %v2003, %v2016
        %s2025 = scalar_lea.vmem %s296, 48 [#allocation13]
        %2026 = vst.msk [vmem:[%s2025] sm:$0xff] %vm1227, %v1672
        %2027 = vst [vmem:[%s2025 + $0x8] sm:$0xff] %v1673
        %2028 = vst.msk [vmem:[%s2025 + $0x10] sm:$0xff] %vm1230, %v1674
        %s2029 = scalar_lea.vmem %s296, 72 [#allocation13]
        %2030 = vst.msk [vmem:[%s2029] sm:$0xff] %vm1227, %v2022
        %2031 = vst [vmem:[%s2029 + $0x8] sm:$0xff] %v2023
        %2032 = vst.msk [vmem:[%s2029 + $0x10] sm:$0xff] %vm1230, %v2024
        %s2033 = sand.u32 %s143, 1
        %s2034 = scalar_lea.sflag [#allocation5], %s2033
        %s2035 = sand.u32 %s143, 1
        %s2036 = smul.addr %s2035, 96
        %s2037 = scalar_lea.vmem [#allocation13], %s2036
        // Predicated region
        $region61: #{tpu_custom_call.1} parent=39 // pred_check
          %p2038 = pneg %p153
        $region62: #{tpu_custom_call.1} parent=39 // pred_check_branch
          %2040 = sbr.rel (%p2038) target = $region64
        $region63: #{tpu_custom_call.1} parent=39 // pred_region
          %2042 = vsyncadd %s2034, 0
          %s2043 = smul.addr %s25, 3
          %s2044 = smul.addr %s2043, 8
          %s2045 = scalar_lea.hbm %s5, %s2044
          %s2046 = sshll.u32 %s2037, 4
          %s2047 = int_to_ptr.vmem [resolvable:$true] %s2046
          %s2048 = sshll.u32 %s2045, 4
          %s2049 = int_to_ptr.hbm [resolvable:$true] %s2048
          %2054 = dma.vmem_to_hbm [thread:$0]  %s2047, 1536, %s2049, %s2034, 384, 768, 24
        $region64: #{tpu_custom_call.1} parent=39 // pred_fallthru
          _
      $region40: #{tpu_custom_call.1} parent=5 // pred_fallthru
        _
      %p2055 = scmp.le.s32.totalorder 2, %s20
      // Predicated region
      $region65: #{tpu_custom_call.1} parent=5 // pred_check
        %p2056 = pneg %p2055
      $region66: #{tpu_custom_call.1} parent=5 // pred_check_branch
        %2058 = sbr.rel (%p2056) target = $region68
      $region67: #{tpu_custom_call.1} parent=5 // pred_region
        %s2059 = ssub.s32 %s20, 2
        // Predicated region
        $region69: #{tpu_custom_call.1} parent=67 // pred_check
          %p2060 = pneg %p159
        $region70: #{tpu_custom_call.1} parent=67 // pred_check_branch
          %2062 = sbr.rel (%p2060) target = $region72
        $region71: #{tpu_custom_call.1} parent=67 // pred_region
          %s2063 = sand.u32 %s144, 1
          %s2064 = scalar_lea.sflag [#allocation5], %s2063
          %s2065 = sand.u32 %s144, 1
          %s2066 = smul.addr %s2065, 96
          %s2067 = scalar_lea.vmem [#allocation13], %s2066
          %2069 = dma.done %s2064, 1536
        $region72: #{tpu_custom_call.1} parent=67 // pred_fallthru
          _
      $region68: #{tpu_custom_call.1} parent=5 // pred_fallthru
        _
    $region6: #{tpu_custom_call.1} parent=1 // loop_footer
      %s24 = sadd.s32 1, %s20
    $region7: #{tpu_custom_call.1} parent=1 // loop_footer_branch
      %19 = sbr.rel target = $region3
    $region8: #{tpu_custom_call.1} parent=1 // loop_exit
      _
    %2070 = vsyncpa [#allocation4], 1
    %s2071 = scalar_lea.sflag [#allocation4], 1
    %2072 = vsyncpa %s2071, 1
    %2073 = vsyncpa [#allocation5], 1
    %s2074 = scalar_lea.sflag [#allocation5], 1
    %2075 = vsyncpa %s2074, 1
    %2076 = vsyncpa [#allocation6], 1
    %s2077 = scalar_lea.sflag [#allocation6], 1
    %2078 = vsyncpa %s2077, 1
    %2079 = vsyncpa [#allocation7], 1
    %s2080 = scalar_lea.sflag [#allocation7], 1
    %2081 = vsyncpa %s2080, 1
    %2082 = vsyncpa [#allocation11], 1

</llo_original>
